<compile_context>
chip_gen: v5e
topology: v5e:2x2
jax: 0.10.0
libtpu: 0.0.40
codegen_flags: <defaults>
</compile_context>

<pallas_src>
import functools
import math

import jax
import jax.numpy as jnp
from jax.experimental import pallas as pl
from jax.experimental.pallas import tpu as pltpu


# ----------------------------------------------------------------------------
# Shared math helpers (used inside the kernel and by the pure-JAX reference)
# ----------------------------------------------------------------------------
def _gelu_tanh(x):
    c = math.sqrt(2.0 / math.pi)
    return 0.5 * x * (1.0 + jnp.tanh(c * (x + 0.044715 * x * x * x)))


def _apply_norm(x, gamma, beta, *, norm_type, eps, adanorm_scale,
                keep_adanorm_second_mean=False):
    """x: [..., H] f32; gamma/beta: [1, H] f32."""
    if norm_type == "layer":
        mean = jnp.mean(x, axis=-1, keepdims=True)
        var = jnp.mean((x - mean) ** 2, axis=-1, keepdims=True)
        xn = (x - mean) * jax.lax.rsqrt(var + eps)
        return xn * gamma + beta
    elif norm_type == "adanorm":
        h = x.shape[-1]
        mean = jnp.mean(x, axis=-1, keepdims=True)
        xc = x - mean
        # torch.std default is unbiased (divide by N-1); translation invariant.
        std = jnp.sqrt(jnp.sum(xc * xc, axis=-1, keepdims=True) / (h - 1))
        if keep_adanorm_second_mean:
            # Faithful to the torch forward (mean of a centered tensor, ~1e-7).
            xc2 = xc - jnp.mean(xc, axis=-1, keepdims=True)
        else:
            xc2 = xc  # kernel fast path: mean of the centered input is ~0
        gra = (0.1 * xc2) / (std + eps)            # .detach() is fwd-identity
        xn = (xc - xc * gra) / (std + eps)
        return xn * adanorm_scale
    elif norm_type == "scalenorm":
        nrm = jnp.sqrt(jnp.sum(x * x, axis=-1, keepdims=True))
        nrm = jnp.maximum(nrm, eps)
        # gamma carries the scalar ScaleNorm `scale` parameter broadcast to [1,H].
        return x * (gamma / nrm)
    else:
        raise ValueError(f"unknown norm_type: {norm_type}")


# ----------------------------------------------------------------------------
# Fused layer kernel
# ----------------------------------------------------------------------------
_CDIMS = (((1,), (1,)), ((), ()))  # contract x dim1 with W dim1  ->  x @ W^T


def _layer_kernel(xq_ref, xs_ref, m_ref,
                  wq_ref, bq_ref, wk_ref, bk_ref, wv_ref, bv_ref,
                  wo_ref, bo_ref, w1_ref, b1_ref, w2_ref, b2_ref,
                  ag_ref, ab_ref, fg_ref, fb_ref,
                  o_ref, ctx_ref,
                  *, norm_type, prenorm, num_heads, eps, adanorm_scale):
    f32, bf16 = jnp.float32, jnp.bfloat16

    x_q = xq_ref[...].astype(f32)       # [TQ, H]  query-tile rows
    x_kv = xs_ref[...].astype(f32)      # [S,  H]  full sequence (for K/V)
    mask = m_ref[...].astype(f32)       # [1,  S]  additive attention mask
    ag, ab = ag_ref[...].astype(f32), ab_ref[...].astype(f32)
    fg, fb = fg_ref[...].astype(f32), fb_ref[...].astype(f32)

    _, hidden = x_q.shape
    hd = hidden // num_heads
    inv_sqrt_hd = 1.0 / math.sqrt(hd)

    norm = functools.partial(_apply_norm, norm_type=norm_type, eps=eps,
                             adanorm_scale=adanorm_scale)

    residual = x_q
    if prenorm:
        h_q, h_kv = norm(x_q, ag, ab), norm(x_kv, ag, ab)
    else:
        h_q, h_kv = x_q, x_kv

    # --- QKV projections: bf16 MXU operands, f32 accumulation ---------------
    hq_b, hkv_b = h_q.astype(bf16), h_kv.astype(bf16)
    q = jax.lax.dot_general(hq_b, wq_ref[...], _CDIMS,
                            preferred_element_type=f32) + bq_ref[...]
    k = jax.lax.dot_general(hkv_b, wk_ref[...], _CDIMS,
                            preferred_element_type=f32) + bk_ref[...]
    v = jax.lax.dot_general(hkv_b, wv_ref[...], _CDIMS,
                            preferred_element_type=f32) + bv_ref[...]

    q = q * inv_sqrt_hd                  # fold 1/sqrt(hd) into Q once
    q_b, k_b, v_b = q.astype(bf16), k.astype(bf16), v.astype(bf16)

    # --- per-head attention; ctx accumulated into a [TQ, H] VMEM slab -------
    for hi in range(num_heads):
        lo = hi * hd
        qh = q_b[:, lo:lo + hd]
        kh = k_b[:, lo:lo + hd]
        vh = v_b[:, lo:lo + hd]
        scores = jax.lax.dot_general(qh, kh, _CDIMS,
                                     preferred_element_type=f32) + mask
        scores = scores - jnp.max(scores, axis=-1, keepdims=True)
        p = jnp.exp(scores)
        denom = jnp.sum(p, axis=-1, keepdims=True)
        p = p * pl.reciprocal(denom)     # exact (approx=True trades ~1e-3 err)
        ctx_ref[:, lo:lo + hd] = jnp.dot(p.astype(bf16), vh,
                                         preferred_element_type=f32)

    # --- single K=H output-projection GEMM ----------------------------------
    attn = jax.lax.dot_general(ctx_ref[...].astype(bf16), wo_ref[...], _CDIMS,
                               preferred_element_type=f32) + bo_ref[...]

    x1 = attn + residual                 # self_dropout = identity (eval)
    if not prenorm:
        x1 = norm(x1, ag, ab)

    residual2 = x1
    hf = norm(x1, fg, fb) if prenorm else x1
    h1 = jax.lax.dot_general(hf.astype(bf16), w1_ref[...], _CDIMS,
                             preferred_element_type=f32) + b1_ref[...]
    h1 = _gelu_tanh(h1)                  # f32 on VPU/EUP (v5e has no bf16 VALU)
    h2 = jax.lax.dot_general(h1.astype(bf16), w2_ref[...], _CDIMS,
                             preferred_element_type=f32) + b2_ref[...]
    out = h2 + residual2                 # ff_dropout = identity (eval)
    if not prenorm:
        out = norm(out, fg, fb)
    o_ref[...] = out.astype(o_ref.dtype)


# ----------------------------------------------------------------------------
# Wrapper helpers
# ----------------------------------------------------------------------------
def _choose_q_block(S):
    if S <= 256:
        return S
    for cand in (256, 128, 64, 32, 16, 8):
        if S % cand == 0:
            return cand
    return S


def _vmem_limit_bytes(B, S, TQ, H, I):
    """Scoped-VMEM request: bf16 weights (double-buffered), activation blocks,
    and the f32 working set; clamped to what the chip can actually provide."""
    w = 2 * (4 * H * H + 2 * H * I)                       # bf16 weights
    p = 4 * (9 * H + I)                                   # f32 biases + norm params
    io = 4 * (2 * TQ * H + S * H + S)                     # x tile, x full, mask, out
    work = 4 * (6 * S * H + 2 * TQ * S + 2 * TQ * I + 8 * TQ * H)
    est = 2 * (w + p + io) + work + (4 << 20)
    floor = 32 << 20
    try:
        cap = int(pltpu.get_tpu_info().vmem_capacity_bytes) - (8 << 20)
    except Exception:
        cap = 56 << 20
    return int(max(floor, min(est, max(cap, floor))))


# ----------------------------------------------------------------------------
# Wrapper
# ----------------------------------------------------------------------------
def variable_norm_transformer_layer(hidden_states, attention_mask, params, *,
                                    norm_type="layer", prenorm=False, num_heads=2,
                                    layer_norm_eps=1e-12, adanorm_scale=0.3,
                                    q_block_size=None):
    """hidden_states: [B, S, H]; attention_mask: additive [B, S] (or None)."""
    B, S, H = hidden_states.shape
    I = params["w1"].shape[0]
    assert H % num_heads == 0
    eps = 1e-5 if norm_type == "scalenorm" else layer_norm_eps
    dtype = hidden_states.dtype

    if attention_mask is None:
        mask_add = jnp.zeros((B, 1, S), jnp.float32)
    else:
        am = attention_mask
        if am.ndim == 2:
            am = am[:, None, :]                            # [B, 1, S]
        mask_add = am.astype(jnp.float32)

    # Query-tile grid axis (keeps both v7x TCs busy even at B=1, bounds the
    # [TQ, S] score tile at long S).
    tq = q_block_size if q_block_size is not None else _choose_q_block(S)
    assert S % tq == 0 and (tq == S or tq % 8 == 0)
    n_q = S // tq

    # bf16 MXU operands: weights pre-cast ONCE outside the kernel (halves the
    # weight DMA traffic and VMEM residency); biases / norm params stay f32.
    bf = lambda a: a.astype(jnp.bfloat16)
    wq, wk, wv, wo = bf(params["wq"]), bf(params["wk"]), bf(params["wv"]), bf(params["wo"])
    w1, w2 = bf(params["w1"]), bf(params["w2"])

    wfull = lambda shape: pl.BlockSpec(shape, lambda b, qi: (0, 0))

    kernel = functools.partial(
        _layer_kernel, norm_type=norm_type, prenorm=prenorm,
        num_heads=num_heads, eps=eps, adanorm_scale=adanorm_scale)

    cost = pl.CostEstimate(
        flops=int(8 * B * S * H * H + 4 * B * S * S * H + 4 * B * S * H * I),
        transcendentals=int(B * num_heads * S * S + B * S * I),
        bytes_accessed=int(4 * (2 * B * S * H + B * S + 9 * H + I)
                           + 2 * (4 * H * H + 2 * H * I)))

    out = pl.pallas_call(
        kernel,
        out_shape=jax.ShapeDtypeStruct((B, S, H), dtype),
        grid=(B, n_q),
        in_specs=[
            pl.BlockSpec((None, tq, H), lambda b, qi: (b, qi, 0)),  # query tile
            pl.BlockSpec((None, S, H), lambda b, qi: (b, 0, 0)),    # full seq (K/V)
            pl.BlockSpec((None, 1, S), lambda b, qi: (b, 0, 0)),    # additive mask
            wfull((H, H)), wfull((1, H)),                           # Wq, bq
            wfull((H, H)), wfull((1, H)),                           # Wk, bk
            wfull((H, H)), wfull((1, H)),                           # Wv, bv
            wfull((H, H)), wfull((1, H)),                           # Wo, bo
            wfull((I, H)), wfull((1, I)),                           # W1, b1
            wfull((H, I)), wfull((1, H)),                           # W2, b2
            wfull((1, H)), wfull((1, H)),                           # attn norm g, b
            wfull((1, H)), wfull((1, H)),                           # ff norm g, b
        ],
        out_specs=pl.BlockSpec((None, tq, H), lambda b, qi: (b, qi, 0)),
        scratch_shapes=[pltpu.VMEM((tq, H), jnp.float32)],          # ctx slab
        compiler_params=pltpu.CompilerParams(
            dimension_semantics=("parallel", "parallel"),
            vmem_limit_bytes=_vmem_limit_bytes(B, S, tq, H, I)),
        cost_estimate=cost,
    )(hidden_states, hidden_states, mask_add,
      wq, params["bq"], wk, params["bk"], wv, params["bv"], wo, params["bo"],
      w1, params["b1"], w2, params["b2"],
      params["attn_norm_gamma"], params["attn_norm_beta"],
      params["ff_norm_gamma"], params["ff_norm_beta"])

    return out, None   # attentions: output_attentions unsupported (see TODO)


# ----------------------------------------------------------------------------
# Pure-JAX reference (mirrors the PyTorch forward, eval mode).  With
# mimic_bf16_matmul=True the reference casts every GEMM operand to bf16 exactly
# where the kernel does, so the comparison stays tight; the pure-f32 torch
# forward differs from the bf16-MXU kernel by ~1e-2 relative (deliberate
# perf tradeoff per the TPU review).
# ----------------------------------------------------------------------------
def _reference_layer(hidden, attention_mask, params, *, norm_type, prenorm,
                     num_heads, layer_norm_eps=1e-12, adanorm_scale=0.3,
                     mimic_bf16_matmul=True):
    B, S, H = hidden.shape
    hd = H // num_heads
    eps = 1e-5 if norm_type == "scalenorm" else layer_norm_eps
    mask = jnp.zeros((B, S), jnp.float32) if attention_mask is None else attention_mask
    mask4 = mask[:, None, None, :].astype(jnp.float32)

    cast = (lambda a: a.astype(jnp.bfloat16)) if mimic_bf16_matmul else (lambda a: a)

    def norm(x, g, b):
        return _apply_norm(x, g, b, norm_type=norm_type, eps=eps,
                           adanorm_scale=adanorm_scale,
                           keep_adanorm_second_mean=True)

    def linear(x, w, b):
        dims = (((x.ndim - 1,), (1,)), ((), ()))
        return jax.lax.dot_general(cast(x), cast(w), dims,
                                   preferred_element_type=jnp.float32) + b

    x = hidden.astype(jnp.float32)
    residual = x
    h = norm(x, params["attn_norm_gamma"], params["attn_norm_beta"]) if prenorm else x
    q = linear(h, params["wq"], params["bq"]) * (1.0 / math.sqrt(hd))
    k = linear(h, params["wk"], params["bk"])
    v = linear(h, params["wv"], params["bv"])
    q = q.reshape(B, S, num_heads, hd).transpose(0, 2, 1, 3)
    k = k.reshape(B, S, num_heads, hd).transpose(0, 2, 1, 3)
    v = v.reshape(B, S, num_heads, hd).transpose(0, 2, 1, 3)
    scores = jnp.einsum("bhqd,bhkd->bhqk", cast(q), cast(k),
                        preferred_element_type=jnp.float32) + mask4
    probs = jax.nn.softmax(scores, axis=-1)
    ctx = jnp.einsum("bhqk,bhkd->bhqd", cast(probs), cast(v),
                     preferred_element_type=jnp.float32)
    ctx = ctx.transpose(0, 2, 1, 3).reshape(B, S, H)
    attn_out = linear(ctx, params["wo"], params["bo"])
    x = attn_out + residual
    if not prenorm:
        x = norm(x, params["attn_norm_gamma"], params["attn_norm_beta"])
    residual = x
    h = norm(x, params["ff_norm_gamma"], params["ff_norm_beta"]) if prenorm else x
    h1 = _gelu_tanh(linear(h, params["w1"], params["b1"]))
    h2 = linear(h1, params["w2"], params["b2"])
    x = h2 + residual
    if not prenorm:
        x = norm(x, params["ff_norm_gamma"], params["ff_norm_beta"])
    return x


# ----------------------------------------------------------------------------
# Deterministic parameter init (nn.Linear default uniform bounds)
# ----------------------------------------------------------------------------
def _init_params(key, H, I, norm_type):
    ks = jax.random.split(key, 12)

    def linear(kw, kb, out_f, in_f):
        bound = 1.0 / math.sqrt(in_f)
        w = jax.random.uniform(kw, (out_f, in_f), minval=-bound, maxval=bound,
                               dtype=jnp.float32)
        b = jax.random.uniform(kb, (1, out_f), minval=-bound, maxval=bound,
                               dtype=jnp.float32)
        return w, b

    wq, bq = linear(ks[0], ks[1], H, H)
    wk, bk = linear(ks[2], ks[3], H, H)
    wv, bv = linear(ks[4], ks[5], H, H)
    wo, bo = linear(ks[6], ks[7], H, H)
    w1, b1 = linear(ks[8], ks[9], I, H)
    w2, b2 = linear(ks[10], ks[11], H, I)

    if norm_type == "layer":
        g = (1.0 + 0.01 * jnp.arange(H, dtype=jnp.float32)).reshape(1, H)
        be = (0.01 * jnp.arange(H, dtype=jnp.float32)).reshape(1, H)
    elif norm_type == "scalenorm":
        g = jnp.full((1, H), math.sqrt(H), dtype=jnp.float32)   # ScaleNorm scale
        be = jnp.zeros((1, H), dtype=jnp.float32)
    else:  # adanorm: no learnable params
        g = jnp.ones((1, H), dtype=jnp.float32)
        be = jnp.zeros((1, H), dtype=jnp.float32)

    return dict(wq=wq, bq=bq, wk=wk, bk=bk, wv=wv, bv=bv, wo=wo, bo=bo,
                w1=w1, b1=b1, w2=w2, b2=b2,
                attn_norm_gamma=g, attn_norm_beta=be,
                ff_norm_gamma=g, ff_norm_beta=be)


if __name__ == "__main__":
    B, S, H, NH, I = 2, 8, 32, 2, 64
    key = jax.random.PRNGKey(0)
    k_x, k_p = jax.random.split(key)

    hidden = jax.random.normal(k_x, (B, S, H), dtype=jnp.float32)
    # Additive attention mask (0 = attend, -1e4 = masked); last two tokens of
    # batch element 1 are padding.
    mask = jnp.zeros((B, S), dtype=jnp.float32).at[1, -2:].set(-10000.0)

    for norm_type, prenorm in (("layer", False), ("adanorm", True), ("scalenorm", True)):
        params = _init_params(k_p, H, I, norm_type)
        out, attn = variable_norm_transformer_layer(
            hidden, mask, params, norm_type=norm_type, prenorm=prenorm,
            num_heads=NH)
        out = jax.block_until_ready(out)
        ref = _reference_layer(hidden, mask, params, norm_type=norm_type,
                               prenorm=prenorm, num_heads=NH,
                               mimic_bf16_matmul=True)
        assert out.shape == (B, S, H)
        err = float(jnp.max(jnp.abs(out - ref)))
        assert jnp.allclose(out, ref, atol=5e-3, rtol=5e-3), (norm_type, prenorm, err)

    print("KERNEL_OK")
</pallas_src>

<mosaic_0001>
module attributes {stable_mosaic.version = 11 : i64} {
  func.func @_layer_kernel(%arg0: i32, %arg1: i32, %arg2: memref<1x8x32xf32, #tpu.memory_space<vmem>>, %arg3: memref<1x8x32xf32, #tpu.memory_space<vmem>>, %arg4: memref<1x1x8xf32, #tpu.memory_space<vmem>>, %arg5: memref<32x32xbf16, #tpu.memory_space<vmem>>, %arg6: memref<1x32xf32, #tpu.memory_space<vmem>>, %arg7: memref<32x32xbf16, #tpu.memory_space<vmem>>, %arg8: memref<1x32xf32, #tpu.memory_space<vmem>>, %arg9: memref<32x32xbf16, #tpu.memory_space<vmem>>, %arg10: memref<1x32xf32, #tpu.memory_space<vmem>>, %arg11: memref<32x32xbf16, #tpu.memory_space<vmem>>, %arg12: memref<1x32xf32, #tpu.memory_space<vmem>>, %arg13: memref<64x32xbf16, #tpu.memory_space<vmem>>, %arg14: memref<1x64xf32, #tpu.memory_space<vmem>>, %arg15: memref<32x64xbf16, #tpu.memory_space<vmem>>, %arg16: memref<1x32xf32, #tpu.memory_space<vmem>>, %arg17: memref<1x32xf32, #tpu.memory_space<vmem>>, %arg18: memref<1x32xf32, #tpu.memory_space<vmem>>, %arg19: memref<1x32xf32, #tpu.memory_space<vmem>>, %arg20: memref<1x32xf32, #tpu.memory_space<vmem>>, %arg21: memref<1x8x32xf32, #tpu.memory_space<vmem>>, %arg22: memref<8x32xf32, #tpu.memory_space<vmem>>) attributes {dimension_semantics = [#tpu.dimension_semantics<parallel>, #tpu.dimension_semantics<parallel>], iteration_bounds = array<i64: 2, 1>, scalar_prefetch = 0 : i64, scratch_operands = 1 : i64, tpu.core_type = #tpu.core_type<tc>, window_params = [{transform_indices = @transform_0, window_bounds = array<i64: 1, 8, 32>}, {transform_indices = @transform_1, window_bounds = array<i64: 1, 8, 32>}, {transform_indices = @transform_2, window_bounds = array<i64: 1, 1, 8>}, {pipeline_mode = #tpu.pipeline_mode<synchronous>, transform_indices = @transform_3, window_bounds = array<i64: 32, 32>}, {pipeline_mode = #tpu.pipeline_mode<synchronous>, transform_indices = @transform_4, window_bounds = array<i64: 1, 32>}, {pipeline_mode = #tpu.pipeline_mode<synchronous>, transform_indices = @transform_5, window_bounds = array<i64: 32, 32>}, {pipeline_mode = #tpu.pipeline_mode<synchronous>, transform_indices = @transform_6, window_bounds = array<i64: 1, 32>}, {pipeline_mode = #tpu.pipeline_mode<synchronous>, transform_indices = @transform_7, window_bounds = array<i64: 32, 32>}, {pipeline_mode = #tpu.pipeline_mode<synchronous>, transform_indices = @transform_8, window_bounds = array<i64: 1, 32>}, {pipeline_mode = #tpu.pipeline_mode<synchronous>, transform_indices = @transform_9, window_bounds = array<i64: 32, 32>}, {pipeline_mode = #tpu.pipeline_mode<synchronous>, transform_indices = @transform_10, window_bounds = array<i64: 1, 32>}, {pipeline_mode = #tpu.pipeline_mode<synchronous>, transform_indices = @transform_11, window_bounds = array<i64: 64, 32>}, {pipeline_mode = #tpu.pipeline_mode<synchronous>, transform_indices = @transform_12, window_bounds = array<i64: 1, 64>}, {pipeline_mode = #tpu.pipeline_mode<synchronous>, transform_indices = @transform_13, window_bounds = array<i64: 32, 64>}, {pipeline_mode = #tpu.pipeline_mode<synchronous>, transform_indices = @transform_14, window_bounds = array<i64: 1, 32>}, {pipeline_mode = #tpu.pipeline_mode<synchronous>, transform_indices = @transform_15, window_bounds = array<i64: 1, 32>}, {pipeline_mode = #tpu.pipeline_mode<synchronous>, transform_indices = @transform_16, window_bounds = array<i64: 1, 32>}, {pipeline_mode = #tpu.pipeline_mode<synchronous>, transform_indices = @transform_17, window_bounds = array<i64: 1, 32>}, {pipeline_mode = #tpu.pipeline_mode<synchronous>, transform_indices = @transform_18, window_bounds = array<i64: 1, 32>}, {transform_indices = @transform_19, window_bounds = array<i64: 1, 8, 32>}]} {
    %c0 = arith.constant 0 : index
    %c0_0 = arith.constant 0 : index
    %c0_1 = arith.constant 0 : index
    %0 = vector.load %arg2[%c0, %c0_0, %c0_1] : memref<1x8x32xf32, #tpu.memory_space<vmem>>, vector<1x8x32xf32>
    %1 = vector.shape_cast %0 : vector<1x8x32xf32> to vector<8x32xf32>
    %c0_2 = arith.constant 0 : index
    %c0_3 = arith.constant 0 : index
    %c0_4 = arith.constant 0 : index
    %2 = vector.load %arg3[%c0_2, %c0_3, %c0_4] : memref<1x8x32xf32, #tpu.memory_space<vmem>>, vector<1x8x32xf32>
    %3 = vector.shape_cast %2 : vector<1x8x32xf32> to vector<8x32xf32>
    %c0_5 = arith.constant 0 : index
    %c0_6 = arith.constant 0 : index
    %c0_7 = arith.constant 0 : index
    %4 = vector.load %arg4[%c0_5, %c0_6, %c0_7] : memref<1x1x8xf32, #tpu.memory_space<vmem>>, vector<1x1x8xf32>
    %5 = vector.shape_cast %4 : vector<1x1x8xf32> to vector<1x8xf32>
    %c0_8 = arith.constant 0 : index
    %c0_9 = arith.constant 0 : index
    %6 = vector.load %arg17[%c0_8, %c0_9] : memref<1x32xf32, #tpu.memory_space<vmem>>, vector<1x32xf32>
    %c0_10 = arith.constant 0 : index
    %c0_11 = arith.constant 0 : index
    %7 = vector.load %arg18[%c0_10, %c0_11] : memref<1x32xf32, #tpu.memory_space<vmem>>, vector<1x32xf32>
    %c0_12 = arith.constant 0 : index
    %c0_13 = arith.constant 0 : index
    %8 = vector.load %arg19[%c0_12, %c0_13] : memref<1x32xf32, #tpu.memory_space<vmem>>, vector<1x32xf32>
    %c0_14 = arith.constant 0 : index
    %c0_15 = arith.constant 0 : index
    %9 = vector.load %arg20[%c0_14, %c0_15] : memref<1x32xf32, #tpu.memory_space<vmem>>, vector<1x32xf32>
    %10 = arith.truncf %1 : vector<8x32xf32> to vector<8x32xbf16>
    %11 = arith.truncf %3 : vector<8x32xf32> to vector<8x32xbf16>
    %c0_16 = arith.constant 0 : index
    %c0_17 = arith.constant 0 : index
    %12 = vector.load %arg5[%c0_16, %c0_17] : memref<32x32xbf16, #tpu.memory_space<vmem>>, vector<32x32xbf16>
    %cst = arith.constant dense<0.000000e+00> : vector<8x32xf32>
    %13 = tpu.matmul %10, %12, %cst {dimension_numbers = #tpu.dot_dimension_numbers<[1], [1], [0], [0], [0, 0, 1, 0], [], []>} : vector<8x32xbf16>, vector<32x32xbf16>, vector<8x32xf32> -> vector<8x32xf32>
    %c0_18 = arith.constant 0 : index
    %c0_19 = arith.constant 0 : index
    %14 = vector.load %arg6[%c0_18, %c0_19] : memref<1x32xf32, #tpu.memory_space<vmem>>, vector<1x32xf32>
    %15 = vector.broadcast %14 : vector<1x32xf32> to vector<8x32xf32>
    %16 = arith.addf %13, %15 : vector<8x32xf32>
    %c0_20 = arith.constant 0 : index
    %c0_21 = arith.constant 0 : index
    %17 = vector.load %arg7[%c0_20, %c0_21] : memref<32x32xbf16, #tpu.memory_space<vmem>>, vector<32x32xbf16>
    %cst_22 = arith.constant dense<0.000000e+00> : vector<8x32xf32>
    %18 = tpu.matmul %11, %17, %cst_22 {dimension_numbers = #tpu.dot_dimension_numbers<[1], [1], [0], [0], [0, 0, 1, 0], [], []>} : vector<8x32xbf16>, vector<32x32xbf16>, vector<8x32xf32> -> vector<8x32xf32>
    %c0_23 = arith.constant 0 : index
    %c0_24 = arith.constant 0 : index
    %19 = vector.load %arg8[%c0_23, %c0_24] : memref<1x32xf32, #tpu.memory_space<vmem>>, vector<1x32xf32>
    %20 = vector.broadcast %19 : vector<1x32xf32> to vector<8x32xf32>
    %21 = arith.addf %18, %20 : vector<8x32xf32>
    %c0_25 = arith.constant 0 : index
    %c0_26 = arith.constant 0 : index
    %22 = vector.load %arg9[%c0_25, %c0_26] : memref<32x32xbf16, #tpu.memory_space<vmem>>, vector<32x32xbf16>
    %cst_27 = arith.constant dense<0.000000e+00> : vector<8x32xf32>
    %23 = tpu.matmul %11, %22, %cst_27 {dimension_numbers = #tpu.dot_dimension_numbers<[1], [1], [0], [0], [0, 0, 1, 0], [], []>} : vector<8x32xbf16>, vector<32x32xbf16>, vector<8x32xf32> -> vector<8x32xf32>
    %c0_28 = arith.constant 0 : index
    %c0_29 = arith.constant 0 : index
    %24 = vector.load %arg10[%c0_28, %c0_29] : memref<1x32xf32, #tpu.memory_space<vmem>>, vector<1x32xf32>
    %25 = vector.broadcast %24 : vector<1x32xf32> to vector<8x32xf32>
    %26 = arith.addf %23, %25 : vector<8x32xf32>
    %cst_30 = arith.constant 2.500000e-01 : f32
    %27 = vector.broadcast %cst_30 : f32 to vector<8x32xf32>
    %28 = arith.mulf %16, %27 : vector<8x32xf32>
    %29 = arith.truncf %28 : vector<8x32xf32> to vector<8x32xbf16>
    %30 = arith.truncf %21 : vector<8x32xf32> to vector<8x32xbf16>
    %31 = arith.truncf %26 : vector<8x32xf32> to vector<8x32xbf16>
    %32 = vector.extract_strided_slice %29 {offsets = [0, 0], sizes = [8, 16], strides = [1, 1]} : vector<8x32xbf16> to vector<8x16xbf16>
    %33 = vector.extract_strided_slice %30 {offsets = [0, 0], sizes = [8, 16], strides = [1, 1]} : vector<8x32xbf16> to vector<8x16xbf16>
    %34 = vector.extract_strided_slice %31 {offsets = [0, 0], sizes = [8, 16], strides = [1, 1]} : vector<8x32xbf16> to vector<8x16xbf16>
    %cst_31 = arith.constant dense<0.000000e+00> : vector<8x8xf32>
    %35 = tpu.matmul %32, %33, %cst_31 {dimension_numbers = #tpu.dot_dimension_numbers<[1], [1], [0], [0], [0, 0, 1, 0], [], []>} : vector<8x16xbf16>, vector<8x16xbf16>, vector<8x8xf32> -> vector<8x8xf32>
    %36 = vector.broadcast %5 : vector<1x8xf32> to vector<8x8xf32>
    %37 = arith.addf %35, %36 : vector<8x8xf32>
    %cst_32 = arith.constant dense<0xFF800000> : vector<8xf32>
    %38 = vector.multi_reduction <maximumf>, %37, %cst_32 [1] : vector<8x8xf32> to vector<8xf32>
    %39 = vector.shape_cast %38 : vector<8xf32> to vector<8x1xf32>
    %40 = vector.broadcast %39 : vector<8x1xf32> to vector<8x8xf32>
    %41 = arith.subf %37, %40 : vector<8x8xf32>
    %42 = math.exp %41 : vector<8x8xf32>
    %cst_33 = arith.constant dense<0.000000e+00> : vector<8xf32>
    %43 = vector.multi_reduction <add>, %42, %cst_33 [1] : vector<8x8xf32> to vector<8xf32>
    %44 = vector.shape_cast %43 : vector<8xf32> to vector<8x1xf32>
    %45 = tpu.reciprocal %44 : vector<8x1xf32> -> vector<8x1xf32>
    %46 = vector.broadcast %45 : vector<8x1xf32> to vector<8x8xf32>
    %47 = arith.mulf %42, %46 : vector<8x8xf32>
    %48 = arith.truncf %47 : vector<8x8xf32> to vector<8x8xbf16>
    %cst_34 = arith.constant dense<0.000000e+00> : vector<8x16xf32>
    %49 = tpu.matmul %48, %34, %cst_34 {dimension_numbers = #tpu.dot_dimension_numbers<[1], [0], [0], [1], [0, 0, 1, 1], [], []>} : vector<8x8xbf16>, vector<8x16xbf16>, vector<8x16xf32> -> vector<8x16xf32>
    %c0_35 = arith.constant 0 : index
    %c0_36 = arith.constant 0 : index
    %50 = vector.load %arg22[%c0_35, %c0_36] : memref<8x32xf32, #tpu.memory_space<vmem>>, vector<8x16xf32>
    tpu.vector_store %arg22[%c0_35, %c0_36], %49 {strides = array<i32>} : memref<8x32xf32, #tpu.memory_space<vmem>>, vector<8x16xf32>,
    %51 = vector.extract_strided_slice %29 {offsets = [0, 16], sizes = [8, 16], strides = [1, 1]} : vector<8x32xbf16> to vector<8x16xbf16>
    %52 = vector.extract_strided_slice %30 {offsets = [0, 16], sizes = [8, 16], strides = [1, 1]} : vector<8x32xbf16> to vector<8x16xbf16>
    %53 = vector.extract_strided_slice %31 {offsets = [0, 16], sizes = [8, 16], strides = [1, 1]} : vector<8x32xbf16> to vector<8x16xbf16>
    %cst_37 = arith.constant dense<0.000000e+00> : vector<8x8xf32>
    %54 = tpu.matmul %51, %52, %cst_37 {dimension_numbers = #tpu.dot_dimension_numbers<[1], [1], [0], [0], [0, 0, 1, 0], [], []>} : vector<8x16xbf16>, vector<8x16xbf16>, vector<8x8xf32> -> vector<8x8xf32>
    %55 = vector.broadcast %5 : vector<1x8xf32> to vector<8x8xf32>
    %56 = arith.addf %54, %55 : vector<8x8xf32>
    %cst_38 = arith.constant dense<0xFF800000> : vector<8xf32>
    %57 = vector.multi_reduction <maximumf>, %56, %cst_38 [1] : vector<8x8xf32> to vector<8xf32>
    %58 = vector.shape_cast %57 : vector<8xf32> to vector<8x1xf32>
    %59 = vector.broadcast %58 : vector<8x1xf32> to vector<8x8xf32>
    %60 = arith.subf %56, %59 : vector<8x8xf32>
    %61 = math.exp %60 : vector<8x8xf32>
    %cst_39 = arith.constant dense<0.000000e+00> : vector<8xf32>
    %62 = vector.multi_reduction <add>, %61, %cst_39 [1] : vector<8x8xf32> to vector<8xf32>
    %63 = vector.shape_cast %62 : vector<8xf32> to vector<8x1xf32>
    %64 = tpu.reciprocal %63 : vector<8x1xf32> -> vector<8x1xf32>
    %65 = vector.broadcast %64 : vector<8x1xf32> to vector<8x8xf32>
    %66 = arith.mulf %61, %65 : vector<8x8xf32>
    %67 = arith.truncf %66 : vector<8x8xf32> to vector<8x8xbf16>
    %cst_40 = arith.constant dense<0.000000e+00> : vector<8x16xf32>
    %68 = tpu.matmul %67, %53, %cst_40 {dimension_numbers = #tpu.dot_dimension_numbers<[1], [0], [0], [1], [0, 0, 1, 1], [], []>} : vector<8x8xbf16>, vector<8x16xbf16>, vector<8x16xf32> -> vector<8x16xf32>
    %c0_41 = arith.constant 0 : index
    %c16 = arith.constant 16 : index
    %69 = vector.load %arg22[%c0_41, %c16] : memref<8x32xf32, #tpu.memory_space<vmem>>, vector<8x16xf32>
    tpu.vector_store %arg22[%c0_41, %c16], %68 {strides = array<i32>} : memref<8x32xf32, #tpu.memory_space<vmem>>, vector<8x16xf32>,
    %c0_42 = arith.constant 0 : index
    %c0_43 = arith.constant 0 : index
    %70 = vector.load %arg22[%c0_42, %c0_43] : memref<8x32xf32, #tpu.memory_space<vmem>>, vector<8x32xf32>
    %71 = arith.truncf %70 : vector<8x32xf32> to vector<8x32xbf16>
    %c0_44 = arith.constant 0 : index
    %c0_45 = arith.constant 0 : index
    %72 = vector.load %arg11[%c0_44, %c0_45] : memref<32x32xbf16, #tpu.memory_space<vmem>>, vector<32x32xbf16>
    %cst_46 = arith.constant dense<0.000000e+00> : vector<8x32xf32>
    %73 = tpu.matmul %71, %72, %cst_46 {dimension_numbers = #tpu.dot_dimension_numbers<[1], [1], [0], [0], [0, 0, 1, 0], [], []>} : vector<8x32xbf16>, vector<32x32xbf16>, vector<8x32xf32> -> vector<8x32xf32>
    %c0_47 = arith.constant 0 : index
    %c0_48 = arith.constant 0 : index
    %74 = vector.load %arg12[%c0_47, %c0_48] : memref<1x32xf32, #tpu.memory_space<vmem>>, vector<1x32xf32>
    %75 = vector.broadcast %74 : vector<1x32xf32> to vector<8x32xf32>
    %76 = arith.addf %73, %75 : vector<8x32xf32>
    %77 = arith.addf %76, %1 : vector<8x32xf32>
    %cst_49 = arith.constant dense<0.000000e+00> : vector<8xf32>
    %78 = vector.multi_reduction <add>, %77, %cst_49 [1] : vector<8x32xf32> to vector<8xf32>
    %79 = vector.shape_cast %78 : vector<8xf32> to vector<8x1xf32>
    %cst_50 = arith.constant 3.200000e+01 : f32
    %80 = vector.broadcast %cst_50 : f32 to vector<8x1xf32>
    %81 = arith.divf %79, %80 : vector<8x1xf32>
    %82 = vector.broadcast %81 : vector<8x1xf32> to vector<8x32xf32>
    %83 = arith.subf %77, %82 : vector<8x32xf32>
    %84 = arith.mulf %83, %83 : vector<8x32xf32>
    %cst_51 = arith.constant dense<0.000000e+00> : vector<8xf32>
    %85 = vector.multi_reduction <add>, %84, %cst_51 [1] : vector<8x32xf32> to vector<8xf32>
    %86 = vector.shape_cast %85 : vector<8xf32> to vector<8x1xf32>
    %cst_52 = arith.constant 3.200000e+01 : f32
    %87 = vector.broadcast %cst_52 : f32 to vector<8x1xf32>
    %88 = arith.divf %86, %87 : vector<8x1xf32>
    %89 = vector.broadcast %81 : vector<8x1xf32> to vector<8x32xf32>
    %90 = arith.subf %77, %89 : vector<8x32xf32>
    %cst_53 = arith.constant 9.99999996E-13 : f32
    %91 = vector.broadcast %cst_53 : f32 to vector<8x1xf32>
    %92 = arith.addf %88, %91 : vector<8x1xf32>
    %93 = math.rsqrt %92 : vector<8x1xf32>
    %94 = vector.broadcast %93 : vector<8x1xf32> to vector<8x32xf32>
    %95 = arith.mulf %90, %94 : vector<8x32xf32>
    %96 = vector.broadcast %6 : vector<1x32xf32> to vector<8x32xf32>
    %97 = arith.mulf %95, %96 : vector<8x32xf32>
    %98 = vector.broadcast %7 : vector<1x32xf32> to vector<8x32xf32>
    %99 = arith.addf %97, %98 : vector<8x32xf32>
    %100 = arith.truncf %99 : vector<8x32xf32> to vector<8x32xbf16>
    %c0_54 = arith.constant 0 : index
    %c0_55 = arith.constant 0 : index
    %101 = vector.load %arg13[%c0_54, %c0_55] : memref<64x32xbf16, #tpu.memory_space<vmem>>, vector<64x32xbf16>
    %cst_56 = arith.constant dense<0.000000e+00> : vector<8x64xf32>
    %102 = tpu.matmul %100, %101, %cst_56 {dimension_numbers = #tpu.dot_dimension_numbers<[1], [1], [0], [0], [0, 0, 1, 0], [], []>} : vector<8x32xbf16>, vector<64x32xbf16>, vector<8x64xf32> -> vector<8x64xf32>
    %c0_57 = arith.constant 0 : index
    %c0_58 = arith.constant 0 : index
    %103 = vector.load %arg14[%c0_57, %c0_58] : memref<1x64xf32, #tpu.memory_space<vmem>>, vector<1x64xf32>
    %104 = vector.broadcast %103 : vector<1x64xf32> to vector<8x64xf32>
    %105 = arith.addf %102, %104 : vector<8x64xf32>
    %cst_59 = arith.constant 5.000000e-01 : f32
    %106 = vector.broadcast %cst_59 : f32 to vector<8x64xf32>
    %107 = arith.mulf %106, %105 : vector<8x64xf32>
    %cst_60 = arith.constant 4.471500e-02 : f32
    %108 = vector.broadcast %cst_60 : f32 to vector<8x64xf32>
    %109 = arith.mulf %108, %105 : vector<8x64xf32>
    %110 = arith.mulf %109, %105 : vector<8x64xf32>
    %111 = arith.mulf %110, %105 : vector<8x64xf32>
    %112 = arith.addf %105, %111 : vector<8x64xf32>
    %cst_61 = arith.constant 0.797884583 : f32
    %113 = vector.broadcast %cst_61 : f32 to vector<8x64xf32>
    %114 = arith.mulf %113, %112 : vector<8x64xf32>
    %115 = math.tanh %114 : vector<8x64xf32>
    %cst_62 = arith.constant 1.000000e+00 : f32
    %116 = vector.broadcast %cst_62 : f32 to vector<8x64xf32>
    %117 = arith.addf %116, %115 : vector<8x64xf32>
    %118 = arith.mulf %107, %117 : vector<8x64xf32>
    %119 = arith.truncf %118 : vector<8x64xf32> to vector<8x64xbf16>
    %c0_63 = arith.constant 0 : index
    %c0_64 = arith.constant 0 : index
    %120 = vector.load %arg15[%c0_63, %c0_64] : memref<32x64xbf16, #tpu.memory_space<vmem>>, vector<32x64xbf16>
    %cst_65 = arith.constant dense<0.000000e+00> : vector<8x32xf32>
    %121 = tpu.matmul %119, %120, %cst_65 {dimension_numbers = #tpu.dot_dimension_numbers<[1], [1], [0], [0], [0, 0, 1, 0], [], []>} : vector<8x64xbf16>, vector<32x64xbf16>, vector<8x32xf32> -> vector<8x32xf32>
    %c0_66 = arith.constant 0 : index
    %c0_67 = arith.constant 0 : index
    %122 = vector.load %arg16[%c0_66, %c0_67] : memref<1x32xf32, #tpu.memory_space<vmem>>, vector<1x32xf32>
    %123 = vector.broadcast %122 : vector<1x32xf32> to vector<8x32xf32>
    %124 = arith.addf %121, %123 : vector<8x32xf32>
    %125 = arith.addf %124, %99 : vector<8x32xf32>
    %cst_68 = arith.constant dense<0.000000e+00> : vector<8xf32>
    %126 = vector.multi_reduction <add>, %125, %cst_68 [1] : vector<8x32xf32> to vector<8xf32>
    %127 = vector.shape_cast %126 : vector<8xf32> to vector<8x1xf32>
    %cst_69 = arith.constant 3.200000e+01 : f32
    %128 = vector.broadcast %cst_69 : f32 to vector<8x1xf32>
    %129 = arith.divf %127, %128 : vector<8x1xf32>
    %130 = vector.broadcast %129 : vector<8x1xf32> to vector<8x32xf32>
    %131 = arith.subf %125, %130 : vector<8x32xf32>
    %132 = arith.mulf %131, %131 : vector<8x32xf32>
    %cst_70 = arith.constant dense<0.000000e+00> : vector<8xf32>
    %133 = vector.multi_reduction <add>, %132, %cst_70 [1] : vector<8x32xf32> to vector<8xf32>
    %134 = vector.shape_cast %133 : vector<8xf32> to vector<8x1xf32>
    %cst_71 = arith.constant 3.200000e+01 : f32
    %135 = vector.broadcast %cst_71 : f32 to vector<8x1xf32>
    %136 = arith.divf %134, %135 : vector<8x1xf32>
    %137 = vector.broadcast %129 : vector<8x1xf32> to vector<8x32xf32>
    %138 = arith.subf %125, %137 : vector<8x32xf32>
    %cst_72 = arith.constant 9.99999996E-13 : f32
    %139 = vector.broadcast %cst_72 : f32 to vector<8x1xf32>
    %140 = arith.addf %136, %139 : vector<8x1xf32>
    %141 = math.rsqrt %140 : vector<8x1xf32>
    %142 = vector.broadcast %141 : vector<8x1xf32> to vector<8x32xf32>
    %143 = arith.mulf %138, %142 : vector<8x32xf32>
    %144 = vector.broadcast %8 : vector<1x32xf32> to vector<8x32xf32>
    %145 = arith.mulf %143, %144 : vector<8x32xf32>
    %146 = vector.broadcast %9 : vector<1x32xf32> to vector<8x32xf32>
    %147 = arith.addf %145, %146 : vector<8x32xf32>
    %c0_73 = arith.constant 0 : index
    %c0_74 = arith.constant 0 : index
    %c0_75 = arith.constant 0 : index
    %148 = vector.load %arg21[%c0_73, %c0_74, %c0_75] : memref<1x8x32xf32, #tpu.memory_space<vmem>>, vector<1x8x32xf32>
    %149 = vector.shape_cast %148 : vector<1x8x32xf32> to vector<8x32xf32>
    %150 = vector.shape_cast %147 : vector<8x32xf32> to vector<1x8x32xf32>
    tpu.vector_store %arg21[%c0_73, %c0_74, %c0_75], %150 {strides = array<i32>} : memref<1x8x32xf32, #tpu.memory_space<vmem>>, vector<1x8x32xf32>,
    return
  }
  func.func @transform_0(%arg0: i32, %arg1: i32) -> (i32, i32, i32) {
    %c0_i32 = arith.constant 0 : i32
    %c0_i32_0 = arith.constant 0 : i32
    return %arg0, %arg1, %c0_i32 : i32, i32, i32
  }
  func.func @transform_1(%arg0: i32, %arg1: i32) -> (i32, i32, i32) {
    %c0_i32 = arith.constant 0 : i32
    %c0_i32_0 = arith.constant 0 : i32
    %c0_i32_1 = arith.constant 0 : i32
    return %arg0, %c0_i32, %c0_i32_0 : i32, i32, i32
  }
  func.func @transform_2(%arg0: i32, %arg1: i32) -> (i32, i32, i32) {
    %c0_i32 = arith.constant 0 : i32
    %c0_i32_0 = arith.constant 0 : i32
    %c0_i32_1 = arith.constant 0 : i32
    return %arg0, %c0_i32, %c0_i32_0 : i32, i32, i32
  }
  func.func @transform_3(%arg0: i32, %arg1: i32) -> (i32, i32) {
    %c0_i32 = arith.constant 0 : i32
    %c0_i32_0 = arith.constant 0 : i32
    %c0_i32_1 = arith.constant 0 : i32
    return %c0_i32, %c0_i32_0 : i32, i32
  }
  func.func @transform_4(%arg0: i32, %arg1: i32) -> (i32, i32) {
    %c0_i32 = arith.constant 0 : i32
    %c0_i32_0 = arith.constant 0 : i32
    %c0_i32_1 = arith.constant 0 : i32
    return %c0_i32, %c0_i32_0 : i32, i32
  }
  func.func @transform_5(%arg0: i32, %arg1: i32) -> (i32, i32) {
    %c0_i32 = arith.constant 0 : i32
    %c0_i32_0 = arith.constant 0 : i32
    %c0_i32_1 = arith.constant 0 : i32
    return %c0_i32, %c0_i32_0 : i32, i32
  }
  func.func @transform_6(%arg0: i32, %arg1: i32) -> (i32, i32) {
    %c0_i32 = arith.constant 0 : i32
    %c0_i32_0 = arith.constant 0 : i32
    %c0_i32_1 = arith.constant 0 : i32
    return %c0_i32, %c0_i32_0 : i32, i32
  }
  func.func @transform_7(%arg0: i32, %arg1: i32) -> (i32, i32) {
    %c0_i32 = arith.constant 0 : i32
    %c0_i32_0 = arith.constant 0 : i32
    %c0_i32_1 = arith.constant 0 : i32
    return %c0_i32, %c0_i32_0 : i32, i32
  }
  func.func @transform_8(%arg0: i32, %arg1: i32) -> (i32, i32) {
    %c0_i32 = arith.constant 0 : i32
    %c0_i32_0 = arith.constant 0 : i32
    %c0_i32_1 = arith.constant 0 : i32
    return %c0_i32, %c0_i32_0 : i32, i32
  }
  func.func @transform_9(%arg0: i32, %arg1: i32) -> (i32, i32) {
    %c0_i32 = arith.constant 0 : i32
    %c0_i32_0 = arith.constant 0 : i32
    %c0_i32_1 = arith.constant 0 : i32
    return %c0_i32, %c0_i32_0 : i32, i32
  }
  func.func @transform_10(%arg0: i32, %arg1: i32) -> (i32, i32) {
    %c0_i32 = arith.constant 0 : i32
    %c0_i32_0 = arith.constant 0 : i32
    %c0_i32_1 = arith.constant 0 : i32
    return %c0_i32, %c0_i32_0 : i32, i32
  }
  func.func @transform_11(%arg0: i32, %arg1: i32) -> (i32, i32) {
    %c0_i32 = arith.constant 0 : i32
    %c0_i32_0 = arith.constant 0 : i32
    %c0_i32_1 = arith.constant 0 : i32
    return %c0_i32, %c0_i32_0 : i32, i32
  }
  func.func @transform_12(%arg0: i32, %arg1: i32) -> (i32, i32) {
    %c0_i32 = arith.constant 0 : i32
    %c0_i32_0 = arith.constant 0 : i32
    %c0_i32_1 = arith.constant 0 : i32
    return %c0_i32, %c0_i32_0 : i32, i32
  }
  func.func @transform_13(%arg0: i32, %arg1: i32) -> (i32, i32) {
    %c0_i32 = arith.constant 0 : i32
    %c0_i32_0 = arith.constant 0 : i32
    %c0_i32_1 = arith.constant 0 : i32
    return %c0_i32, %c0_i32_0 : i32, i32
  }
  func.func @transform_14(%arg0: i32, %arg1: i32) -> (i32, i32) {
    %c0_i32 = arith.constant 0 : i32
    %c0_i32_0 = arith.constant 0 : i32
    %c0_i32_1 = arith.constant 0 : i32
    return %c0_i32, %c0_i32_0 : i32, i32
  }
  func.func @transform_15(%arg0: i32, %arg1: i32) -> (i32, i32) {
    %c0_i32 = arith.constant 0 : i32
    %c0_i32_0 = arith.constant 0 : i32
    %c0_i32_1 = arith.constant 0 : i32
    return %c0_i32, %c0_i32_0 : i32, i32
  }
  func.func @transform_16(%arg0: i32, %arg1: i32) -> (i32, i32) {
    %c0_i32 = arith.constant 0 : i32
    %c0_i32_0 = arith.constant 0 : i32
    %c0_i32_1 = arith.constant 0 : i32
    return %c0_i32, %c0_i32_0 : i32, i32
  }
  func.func @transform_17(%arg0: i32, %arg1: i32) -> (i32, i32) {
    %c0_i32 = arith.constant 0 : i32
    %c0_i32_0 = arith.constant 0 : i32
    %c0_i32_1 = arith.constant 0 : i32
    return %c0_i32, %c0_i32_0 : i32, i32
  }
  func.func @transform_18(%arg0: i32, %arg1: i32) -> (i32, i32) {
    %c0_i32 = arith.constant 0 : i32
    %c0_i32_0 = arith.constant 0 : i32
    %c0_i32_1 = arith.constant 0 : i32
    return %c0_i32, %c0_i32_0 : i32, i32
  }
  func.func @transform_19(%arg0: i32, %arg1: i32) -> (i32, i32, i32) {
    %c0_i32 = arith.constant 0 : i32
    %c0_i32_0 = arith.constant 0 : i32
    return %arg0, %arg1, %c0_i32 : i32, i32, i32
  }
}

</mosaic_0001>

<llo_original>
// kernel: tpu_custom_call.1
$region0: #{tpu_custom_call.1}
  #allocation0 [shape = 'u32[]', space=smem, size = 0x4, offset = 0x4, fixed_abs, tag = 'smem constant byte address 0x4 - core index']
  #allocation1 [shape = 'u32[72,128]{1,0:T(1,128)}', space=vmem, size = 0x9000, scoped, tag = 'internal scratch']
  #allocation2 [shape = 'f32[8,32]{1,0:T(8,128)}', space=vmem, size = 0x1000, scoped, tag = 'scratch operand']
  %s0 = inlined_call_operand.vmem [shape: f32[2,8,32], index: 0, kind: input, shape index: {}]
  %s1 = inlined_call_operand.vmem [shape: f32[2,8,32], index: 1, kind: input, shape index: {}]
  %s2 = inlined_call_operand.hbm [shape: f32[2,1,8], index: 2, kind: input, shape index: {}]
  %s3 = inlined_call_operand.vmem [shape: bf16[32,32], index: 3, kind: input, shape index: {}]
  %s4 = inlined_call_operand.vmem [shape: f32[1,32], index: 4, kind: input, shape index: {}]
  %s5 = inlined_call_operand.hbm [shape: bf16[32,32], index: 5, kind: input, shape index: {}]
  %s6 = inlined_call_operand.vmem [shape: f32[1,32], index: 6, kind: input, shape index: {}]
  %s7 = inlined_call_operand.hbm [shape: bf16[32,32], index: 7, kind: input, shape index: {}]
  %s8 = inlined_call_operand.vmem [shape: f32[1,32], index: 8, kind: input, shape index: {}]
  %s9 = inlined_call_operand.hbm [shape: bf16[32,32], index: 9, kind: input, shape index: {}]
  %s10 = inlined_call_operand.vmem [shape: f32[1,32], index: 10, kind: input, shape index: {}]
  %s11 = inlined_call_operand.vmem [shape: bf16[64,32], index: 11, kind: input, shape index: {}]
  %s12 = inlined_call_operand.vmem [shape: f32[1,64], index: 12, kind: input, shape index: {}]
  %s13 = inlined_call_operand.hbm [shape: bf16[32,64], index: 13, kind: input, shape index: {}]
  %s14 = inlined_call_operand.vmem [shape: f32[1,32], index: 14, kind: input, shape index: {}]
  %s15 = inlined_call_operand.vmem [shape: f32[1,32], index: 15, kind: input, shape index: {}]
  %s16 = inlined_call_operand.vmem [shape: f32[1,32], index: 16, kind: input, shape index: {}]
  %s17 = inlined_call_operand.vmem [shape: f32[1,32], index: 17, kind: input, shape index: {}]
  %s18 = inlined_call_operand.vmem [shape: f32[1,32], index: 18, kind: input, shape index: {}]
  %s19 = inlined_call_operand.hbm [shape: f32[2,8,32], index: 19, kind: output, shape index: {}]
  %s20 = sld [smem:[#allocation0]]
  $region129: #{tpu_custom_call.1} parent=0
    _
  %s22 = ssub.s32 1, %s20
  %s23 = scalar_select 0, %s22, %s20
  $region1: #{tpu_custom_call.1} parent=0
    #allocation3 [shape = 'u8[1024]{0}', space=vmem, size = 0x400, scoped, tag = 'input window, operand 2']
    #allocation4 [shape = 's32[2]{0}', space=sflag, size = 0x8, scoped, tag = 'scoped memory for tpu_custom_call.1']
    #allocation5 [shape = 's32[2]{0}', space=sflag, size = 0x8, scoped, tag = 'scoped memory for tpu_custom_call.1']
    #allocation6 [shape = 'u8[8192]{0}', space=vmem, size = 0x2000, scoped, tag = 'input window, operand 5, single buffered']
    #allocation7 [shape = 's32[1]{0}', space=sflag, size = 0x4, scoped, tag = 'scoped memory for tpu_custom_call.1']
    #allocation8 [shape = 'u8[8192]{0}', space=vmem, size = 0x2000, scoped, tag = 'input window, operand 7, single buffered']
    #allocation9 [shape = 'u8[8192]{0}', space=vmem, size = 0x2000, scoped, tag = 'input window, operand 9, single buffered']
    #allocation10 [shape = 's32[1]{0}', space=sflag, size = 0x4, scoped, tag = 'scoped memory for tpu_custom_call.1']
    #allocation11 [shape = 'u8[8192]{0}', space=vmem, size = 0x2000, scoped, tag = 'input window, operand 13, single buffered']
    #allocation12 [shape = 'u8[8192]{0}', space=vmem, size = 0x2000, scoped, tag = 'output window, operand 0']
    %24 = vsyncpa [#allocation4], 0
    %s25 = scalar_lea.sflag [#allocation4], 1
    %26 = vsyncpa %s25, 0
    %27 = vsyncpa [#allocation7], 0
    %28 = vsyncpa [#allocation10], 0
    %29 = vsyncpa [#allocation5], 0
    %s30 = scalar_lea.sflag [#allocation5], 1
    %31 = vsyncpa %s30, 0
    loop: start=0, step=1, limit=4
    $region2: #{tpu_custom_call.1} parent=1 // loop_pre_header
      _
    $region3: #{tpu_custom_call.1} parent=1 // loop_header
      %s33 = sphi 0, %s37
      %p34 = scmp.ge.s32.totalorder %s33, 4
      %s40 = sphi 0, %s52
      %s41 = sphi 0, %s48
      %s42 = sphi 0, %s40
      %s43 = sphi 0, %s41
      %s44 = sphi 0, %s42
      %s45 = sphi 0, %s43
      %s57 = sphi 0, %s59
      %s60 = sphi 0, %s57
      %s61 = sphi 0, %s60
      %s77 = sphi 0, %s61
      %s83 = sphi 0, %s85
      %s86 = sphi 0, %s83
      %s87 = sphi 0, %s86
      %s103 = sphi 0, %s87
      %s109 = sphi 0, %s111
      %s112 = sphi 0, %s109
      %s113 = sphi 0, %s112
      %s129 = sphi 0, %s113
      %s133 = sphi 0, %s133
      %s135 = sphi 0, %s133
      %s136 = sphi 0, %s135
      %s150 = sphi 0, %s136
      %s154 = sphi 0, %s154
      %s156 = sphi 0, %s154
      %s157 = sphi 0, %s156
      %s171 = sphi 0, %s157
      %s175 = sphi 0, %s175
      %s177 = sphi 0, %s175
      %s178 = sphi 0, %s177
      %s192 = sphi 0, %s178
      %s196 = sphi 0, %s196
      %s198 = sphi 0, %s196
      %s199 = sphi 0, %s198
      %s213 = sphi 0, %s199
      %s217 = sphi 0, %s217
      %s219 = sphi 0, %s217
      %s220 = sphi 0, %s219
      %s234 = sphi 0, %s220
      %s238 = sphi 0, %s238
      %s240 = sphi 0, %s238
      %s241 = sphi 0, %s240
      %s255 = sphi 0, %s241
      %s259 = sphi 0, %s259
      %s261 = sphi 0, %s259
      %s262 = sphi 0, %s261
      %s276 = sphi 0, %s262
      %s280 = sphi 0, %s280
      %s282 = sphi 0, %s280
      %s283 = sphi 0, %s282
      %s297 = sphi 0, %s283
      %s301 = sphi 0, %s301
      %s303 = sphi 0, %s301
      %s304 = sphi 0, %s303
      %s318 = sphi 0, %s304
      %s322 = sphi 0, %s322
      %s324 = sphi 0, %s322
      %s325 = sphi 0, %s324
      %s339 = sphi 0, %s325
      %s343 = sphi 0, %s343
      %s345 = sphi 0, %s343
      %s346 = sphi 0, %s345
      %s360 = sphi 0, %s346
      %s364 = sphi 0, %s364
      %s366 = sphi 0, %s364
      %s367 = sphi 0, %s366
      %s381 = sphi 0, %s367
      %s385 = sphi 0, %s385
      %s387 = sphi 0, %s385
      %s388 = sphi 0, %s387
      %s402 = sphi 0, %s388
      %s406 = sphi 0, %s406
      %s408 = sphi 0, %s406
      %s409 = sphi 0, %s408
      %s423 = sphi 0, %s409
      %s427 = sphi 0, %s427
      %s429 = sphi 0, %s427
      %s430 = sphi 0, %s429
      %s444 = sphi 0, %s430
      %s448 = sphi 0, %s448
      %s450 = sphi 0, %s448
      %s451 = sphi 0, %s450
      %s465 = sphi 0, %s451
      %s473 = sphi 0, %s475
      %s476 = sphi 0, %s473
      %s477 = sphi 0, %s476
      %s493 = sphi 0, %s477
    $region4: #{tpu_custom_call.1} parent=1 // loop_header_branch
      %36 = sbr.rel (%p34) target = $region8
    $region5: #{tpu_custom_call.1} parent=1 // loop_body
      %s38 = ssub.s32 %s33, 1
      %s39 = ssub.s32 %s33, 2
      %s46 = sadd.s32 1, %s41
      %p47 = scmp.ge.s32.totalorder %s46, 1
      %s48 = scalar_select %p47, 0, %s46
      %s49 = sadd.s32 1, %s40
      %s50 = scalar_select %p47, %s49, %s40
      %p51 = scmp.ge.s32.totalorder %s50, 2
      %s52 = scalar_select %p51, 0, %s50
      %s53 = ssub.s32 %s40, %s52
      %s54 = ssub.s32 %s41, %s48
      %s55 = sor.u32 %s53, %s54
      %p56 = scmp.eq.s32.totalorder %s55, 0
      %s58 = sadd.s32 %s57, 1
      %s59 = scalar_select %p56, %s57, %s58
      %p62 = pneg %p56
      %p63 = scmp.eq.s32.totalorder %s33, 1
      %p64 = por %p62, %p63
      %p65 = scmp.ne.s32.totalorder %s57, %s60
      %p66 = scmp.eq.s32.totalorder %s33, 0
      %p67 = por %p65, %p66
      %p68 = scmp.ne.s32.totalorder %s57, %s60
      %p69 = scmp.eq.s32.totalorder %s38, 1
      %p70 = por %p68, %p69
      %p71 = scmp.ne.s32.totalorder %s60, %s61
      %p72 = scmp.eq.s32.totalorder %s38, 0
      %p73 = por %p71, %p72
      %p74 = scmp.ne.s32.totalorder %s60, %s61
      %p75 = scmp.eq.s32.totalorder %s39, 1
      %p76 = por %p74, %p75
      %p78 = scmp.ne.s32.totalorder %s61, %s77
      %p79 = scmp.eq.s32.totalorder %s39, 0
      %p80 = por %p78, %p79
      %s81 = ssub.s32 %s40, %s52
      %p82 = scmp.eq.s32.totalorder %s81, 0
      %s84 = sadd.s32 %s83, 1
      %s85 = scalar_select %p82, %s83, %s84
      %p88 = pneg %p82
      %p89 = scmp.eq.s32.totalorder %s33, 1
      %p90 = por %p88, %p89
      %p91 = scmp.ne.s32.totalorder %s83, %s86
      %p92 = scmp.eq.s32.totalorder %s33, 0
      %p93 = por %p91, %p92
      %p94 = scmp.ne.s32.totalorder %s83, %s86
      %p95 = scmp.eq.s32.totalorder %s38, 1
      %p96 = por %p94, %p95
      %p97 = scmp.ne.s32.totalorder %s86, %s87
      %p98 = scmp.eq.s32.totalorder %s38, 0
      %p99 = por %p97, %p98
      %p100 = scmp.ne.s32.totalorder %s86, %s87
      %p101 = scmp.eq.s32.totalorder %s39, 1
      %p102 = por %p100, %p101
      %p104 = scmp.ne.s32.totalorder %s87, %s103
      %p105 = scmp.eq.s32.totalorder %s39, 0
      %p106 = por %p104, %p105
      %s107 = ssub.s32 %s40, %s52
      %p108 = scmp.eq.s32.totalorder %s107, 0
      %s110 = sadd.s32 %s109, 1
      %s111 = scalar_select %p108, %s109, %s110
      %p114 = pneg %p108
      %p115 = scmp.eq.s32.totalorder %s33, 1
      %p116 = por %p114, %p115
      %p117 = scmp.ne.s32.totalorder %s109, %s112
      %p118 = scmp.eq.s32.totalorder %s33, 0
      %p119 = por %p117, %p118
      %p120 = scmp.ne.s32.totalorder %s109, %s112
      %p121 = scmp.eq.s32.totalorder %s38, 1
      %p122 = por %p120, %p121
      %p123 = scmp.ne.s32.totalorder %s112, %s113
      %p124 = scmp.eq.s32.totalorder %s38, 0
      %p125 = por %p123, %p124
      %p126 = scmp.ne.s32.totalorder %s112, %s113
      %p127 = scmp.eq.s32.totalorder %s39, 1
      %p128 = por %p126, %p127
      %p130 = scmp.ne.s32.totalorder %s113, %s129
      %p131 = scmp.eq.s32.totalorder %s39, 0
      %p132 = por %p130, %p131
      %s134 = sadd.s32 %s133, 1
      %p137 = scmp.eq.s32.totalorder %s33, 1
      %p138 = scmp.ne.s32.totalorder %s133, %s135
      %p139 = scmp.eq.s32.totalorder %s33, 0
      %p140 = por %p138, %p139
      %p141 = scmp.ne.s32.totalorder %s133, %s135
      %p142 = scmp.eq.s32.totalorder %s38, 1
      %p143 = por %p141, %p142
      %p144 = scmp.ne.s32.totalorder %s135, %s136
      %p145 = scmp.eq.s32.totalorder %s38, 0
      %p146 = por %p144, %p145
      %p147 = scmp.ne.s32.totalorder %s135, %s136
      %p148 = scmp.eq.s32.totalorder %s39, 1
      %p149 = por %p147, %p148
      %p151 = scmp.ne.s32.totalorder %s136, %s150
      %p152 = scmp.eq.s32.totalorder %s39, 0
      %p153 = por %p151, %p152
      %s155 = sadd.s32 %s154, 1
      %p158 = scmp.eq.s32.totalorder %s33, 1
      %p159 = scmp.ne.s32.totalorder %s154, %s156
      %p160 = scmp.eq.s32.totalorder %s33, 0
      %p161 = por %p159, %p160
      %p162 = scmp.ne.s32.totalorder %s154, %s156
      %p163 = scmp.eq.s32.totalorder %s38, 1
      %p164 = por %p162, %p163
      %p165 = scmp.ne.s32.totalorder %s156, %s157
      %p166 = scmp.eq.s32.totalorder %s38, 0
      %p167 = por %p165, %p166
      %p168 = scmp.ne.s32.totalorder %s156, %s157
      %p169 = scmp.eq.s32.totalorder %s39, 1
      %p170 = por %p168, %p169
      %p172 = scmp.ne.s32.totalorder %s157, %s171
      %p173 = scmp.eq.s32.totalorder %s39, 0
      %p174 = por %p172, %p173
      %s176 = sadd.s32 %s175, 1
      %p179 = scmp.eq.s32.totalorder %s33, 1
      %p180 = scmp.ne.s32.totalorder %s175, %s177
      %p181 = scmp.eq.s32.totalorder %s33, 0
      %p182 = por %p180, %p181
      %p183 = scmp.ne.s32.totalorder %s175, %s177
      %p184 = scmp.eq.s32.totalorder %s38, 1
      %p185 = por %p183, %p184
      %p186 = scmp.ne.s32.totalorder %s177, %s178
      %p187 = scmp.eq.s32.totalorder %s38, 0
      %p188 = por %p186, %p187
      %p189 = scmp.ne.s32.totalorder %s177, %s178
      %p190 = scmp.eq.s32.totalorder %s39, 1
      %p191 = por %p189, %p190
      %p193 = scmp.ne.s32.totalorder %s178, %s192
      %p194 = scmp.eq.s32.totalorder %s39, 0
      %p195 = por %p193, %p194
      %s197 = sadd.s32 %s196, 1
      %p200 = scmp.eq.s32.totalorder %s33, 1
      %p201 = scmp.ne.s32.totalorder %s196, %s198
      %p202 = scmp.eq.s32.totalorder %s33, 0
      %p203 = por %p201, %p202
      %p204 = scmp.ne.s32.totalorder %s196, %s198
      %p205 = scmp.eq.s32.totalorder %s38, 1
      %p206 = por %p204, %p205
      %p207 = scmp.ne.s32.totalorder %s198, %s199
      %p208 = scmp.eq.s32.totalorder %s38, 0
      %p209 = por %p207, %p208
      %p210 = scmp.ne.s32.totalorder %s198, %s199
      %p211 = scmp.eq.s32.totalorder %s39, 1
      %p212 = por %p210, %p211
      %p214 = scmp.ne.s32.totalorder %s199, %s213
      %p215 = scmp.eq.s32.totalorder %s39, 0
      %p216 = por %p214, %p215
      %s218 = sadd.s32 %s217, 1
      %p221 = scmp.eq.s32.totalorder %s33, 1
      %p222 = scmp.ne.s32.totalorder %s217, %s219
      %p223 = scmp.eq.s32.totalorder %s33, 0
      %p224 = por %p222, %p223
      %p225 = scmp.ne.s32.totalorder %s217, %s219
      %p226 = scmp.eq.s32.totalorder %s38, 1
      %p227 = por %p225, %p226
      %p228 = scmp.ne.s32.totalorder %s219, %s220
      %p229 = scmp.eq.s32.totalorder %s38, 0
      %p230 = por %p228, %p229
      %p231 = scmp.ne.s32.totalorder %s219, %s220
      %p232 = scmp.eq.s32.totalorder %s39, 1
      %p233 = por %p231, %p232
      %p235 = scmp.ne.s32.totalorder %s220, %s234
      %p236 = scmp.eq.s32.totalorder %s39, 0
      %p237 = por %p235, %p236
      %s239 = sadd.s32 %s238, 1
      %p242 = scmp.eq.s32.totalorder %s33, 1
      %p243 = scmp.ne.s32.totalorder %s238, %s240
      %p244 = scmp.eq.s32.totalorder %s33, 0
      %p245 = por %p243, %p244
      %p246 = scmp.ne.s32.totalorder %s238, %s240
      %p247 = scmp.eq.s32.totalorder %s38, 1
      %p248 = por %p246, %p247
      %p249 = scmp.ne.s32.totalorder %s240, %s241
      %p250 = scmp.eq.s32.totalorder %s38, 0
      %p251 = por %p249, %p250
      %p252 = scmp.ne.s32.totalorder %s240, %s241
      %p253 = scmp.eq.s32.totalorder %s39, 1
      %p254 = por %p252, %p253
      %p256 = scmp.ne.s32.totalorder %s241, %s255
      %p257 = scmp.eq.s32.totalorder %s39, 0
      %p258 = por %p256, %p257
      %s260 = sadd.s32 %s259, 1
      %p263 = scmp.eq.s32.totalorder %s33, 1
      %p264 = scmp.ne.s32.totalorder %s259, %s261
      %p265 = scmp.eq.s32.totalorder %s33, 0
      %p266 = por %p264, %p265
      %p267 = scmp.ne.s32.totalorder %s259, %s261
      %p268 = scmp.eq.s32.totalorder %s38, 1
      %p269 = por %p267, %p268
      %p270 = scmp.ne.s32.totalorder %s261, %s262
      %p271 = scmp.eq.s32.totalorder %s38, 0
      %p272 = por %p270, %p271
      %p273 = scmp.ne.s32.totalorder %s261, %s262
      %p274 = scmp.eq.s32.totalorder %s39, 1
      %p275 = por %p273, %p274
      %p277 = scmp.ne.s32.totalorder %s262, %s276
      %p278 = scmp.eq.s32.totalorder %s39, 0
      %p279 = por %p277, %p278
      %s281 = sadd.s32 %s280, 1
      %p284 = scmp.eq.s32.totalorder %s33, 1
      %p285 = scmp.ne.s32.totalorder %s280, %s282
      %p286 = scmp.eq.s32.totalorder %s33, 0
      %p287 = por %p285, %p286
      %p288 = scmp.ne.s32.totalorder %s280, %s282
      %p289 = scmp.eq.s32.totalorder %s38, 1
      %p290 = por %p288, %p289
      %p291 = scmp.ne.s32.totalorder %s282, %s283
      %p292 = scmp.eq.s32.totalorder %s38, 0
      %p293 = por %p291, %p292
      %p294 = scmp.ne.s32.totalorder %s282, %s283
      %p295 = scmp.eq.s32.totalorder %s39, 1
      %p296 = por %p294, %p295
      %p298 = scmp.ne.s32.totalorder %s283, %s297
      %p299 = scmp.eq.s32.totalorder %s39, 0
      %p300 = por %p298, %p299
      %s302 = sadd.s32 %s301, 1
      %p305 = scmp.eq.s32.totalorder %s33, 1
      %p306 = scmp.ne.s32.totalorder %s301, %s303
      %p307 = scmp.eq.s32.totalorder %s33, 0
      %p308 = por %p306, %p307
      %p309 = scmp.ne.s32.totalorder %s301, %s303
      %p310 = scmp.eq.s32.totalorder %s38, 1
      %p311 = por %p309, %p310
      %p312 = scmp.ne.s32.totalorder %s303, %s304
      %p313 = scmp.eq.s32.totalorder %s38, 0
      %p314 = por %p312, %p313
      %p315 = scmp.ne.s32.totalorder %s303, %s304
      %p316 = scmp.eq.s32.totalorder %s39, 1
      %p317 = por %p315, %p316
      %p319 = scmp.ne.s32.totalorder %s304, %s318
      %p320 = scmp.eq.s32.totalorder %s39, 0
      %p321 = por %p319, %p320
      %s323 = sadd.s32 %s322, 1
      %p326 = scmp.eq.s32.totalorder %s33, 1
      %p327 = scmp.ne.s32.totalorder %s322, %s324
      %p328 = scmp.eq.s32.totalorder %s33, 0
      %p329 = por %p327, %p328
      %p330 = scmp.ne.s32.totalorder %s322, %s324
      %p331 = scmp.eq.s32.totalorder %s38, 1
      %p332 = por %p330, %p331
      %p333 = scmp.ne.s32.totalorder %s324, %s325
      %p334 = scmp.eq.s32.totalorder %s38, 0
      %p335 = por %p333, %p334
      %p336 = scmp.ne.s32.totalorder %s324, %s325
      %p337 = scmp.eq.s32.totalorder %s39, 1
      %p338 = por %p336, %p337
      %p340 = scmp.ne.s32.totalorder %s325, %s339
      %p341 = scmp.eq.s32.totalorder %s39, 0
      %p342 = por %p340, %p341
      %s344 = sadd.s32 %s343, 1
      %p347 = scmp.eq.s32.totalorder %s33, 1
      %p348 = scmp.ne.s32.totalorder %s343, %s345
      %p349 = scmp.eq.s32.totalorder %s33, 0
      %p350 = por %p348, %p349
      %p351 = scmp.ne.s32.totalorder %s343, %s345
      %p352 = scmp.eq.s32.totalorder %s38, 1
      %p353 = por %p351, %p352
      %p354 = scmp.ne.s32.totalorder %s345, %s346
      %p355 = scmp.eq.s32.totalorder %s38, 0
      %p356 = por %p354, %p355
      %p357 = scmp.ne.s32.totalorder %s345, %s346
      %p358 = scmp.eq.s32.totalorder %s39, 1
      %p359 = por %p357, %p358
      %p361 = scmp.ne.s32.totalorder %s346, %s360
      %p362 = scmp.eq.s32.totalorder %s39, 0
      %p363 = por %p361, %p362
      %s365 = sadd.s32 %s364, 1
      %p368 = scmp.eq.s32.totalorder %s33, 1
      %p369 = scmp.ne.s32.totalorder %s364, %s366
      %p370 = scmp.eq.s32.totalorder %s33, 0
      %p371 = por %p369, %p370
      %p372 = scmp.ne.s32.totalorder %s364, %s366
      %p373 = scmp.eq.s32.totalorder %s38, 1
      %p374 = por %p372, %p373
      %p375 = scmp.ne.s32.totalorder %s366, %s367
      %p376 = scmp.eq.s32.totalorder %s38, 0
      %p377 = por %p375, %p376
      %p378 = scmp.ne.s32.totalorder %s366, %s367
      %p379 = scmp.eq.s32.totalorder %s39, 1
      %p380 = por %p378, %p379
      %p382 = scmp.ne.s32.totalorder %s367, %s381
      %p383 = scmp.eq.s32.totalorder %s39, 0
      %p384 = por %p382, %p383
      %s386 = sadd.s32 %s385, 1
      %p389 = scmp.eq.s32.totalorder %s33, 1
      %p390 = scmp.ne.s32.totalorder %s385, %s387
      %p391 = scmp.eq.s32.totalorder %s33, 0
      %p392 = por %p390, %p391
      %p393 = scmp.ne.s32.totalorder %s385, %s387
      %p394 = scmp.eq.s32.totalorder %s38, 1
      %p395 = por %p393, %p394
      %p396 = scmp.ne.s32.totalorder %s387, %s388
      %p397 = scmp.eq.s32.totalorder %s38, 0
      %p398 = por %p396, %p397
      %p399 = scmp.ne.s32.totalorder %s387, %s388
      %p400 = scmp.eq.s32.totalorder %s39, 1
      %p401 = por %p399, %p400
      %p403 = scmp.ne.s32.totalorder %s388, %s402
      %p404 = scmp.eq.s32.totalorder %s39, 0
      %p405 = por %p403, %p404
      %s407 = sadd.s32 %s406, 1
      %p410 = scmp.eq.s32.totalorder %s33, 1
      %p411 = scmp.ne.s32.totalorder %s406, %s408
      %p412 = scmp.eq.s32.totalorder %s33, 0
      %p413 = por %p411, %p412
      %p414 = scmp.ne.s32.totalorder %s406, %s408
      %p415 = scmp.eq.s32.totalorder %s38, 1
      %p416 = por %p414, %p415
      %p417 = scmp.ne.s32.totalorder %s408, %s409
      %p418 = scmp.eq.s32.totalorder %s38, 0
      %p419 = por %p417, %p418
      %p420 = scmp.ne.s32.totalorder %s408, %s409
      %p421 = scmp.eq.s32.totalorder %s39, 1
      %p422 = por %p420, %p421
      %p424 = scmp.ne.s32.totalorder %s409, %s423
      %p425 = scmp.eq.s32.totalorder %s39, 0
      %p426 = por %p424, %p425
      %s428 = sadd.s32 %s427, 1
      %p431 = scmp.eq.s32.totalorder %s33, 1
      %p432 = scmp.ne.s32.totalorder %s427, %s429
      %p433 = scmp.eq.s32.totalorder %s33, 0
      %p434 = por %p432, %p433
      %p435 = scmp.ne.s32.totalorder %s427, %s429
      %p436 = scmp.eq.s32.totalorder %s38, 1
      %p437 = por %p435, %p436
      %p438 = scmp.ne.s32.totalorder %s429, %s430
      %p439 = scmp.eq.s32.totalorder %s38, 0
      %p440 = por %p438, %p439
      %p441 = scmp.ne.s32.totalorder %s429, %s430
      %p442 = scmp.eq.s32.totalorder %s39, 1
      %p443 = por %p441, %p442
      %p445 = scmp.ne.s32.totalorder %s430, %s444
      %p446 = scmp.eq.s32.totalorder %s39, 0
      %p447 = por %p445, %p446
      %s449 = sadd.s32 %s448, 1
      %p452 = scmp.eq.s32.totalorder %s33, 1
      %p453 = scmp.ne.s32.totalorder %s448, %s450
      %p454 = scmp.eq.s32.totalorder %s33, 0
      %p455 = por %p453, %p454
      %p456 = scmp.ne.s32.totalorder %s448, %s450
      %p457 = scmp.eq.s32.totalorder %s38, 1
      %p458 = por %p456, %p457
      %p459 = scmp.ne.s32.totalorder %s450, %s451
      %p460 = scmp.eq.s32.totalorder %s38, 0
      %p461 = por %p459, %p460
      %p462 = scmp.ne.s32.totalorder %s450, %s451
      %p463 = scmp.eq.s32.totalorder %s39, 1
      %p464 = por %p462, %p463
      %p466 = scmp.ne.s32.totalorder %s451, %s465
      %p467 = scmp.eq.s32.totalorder %s39, 0
      %p468 = por %p466, %p467
      %s469 = ssub.s32 %s40, %s52
      %s470 = ssub.s32 %s41, %s48
      %s471 = sor.u32 %s469, %s470
      %p472 = scmp.eq.s32.totalorder %s471, 0
      %s474 = sadd.s32 %s473, 1
      %s475 = scalar_select %p472, %s473, %s474
      %p478 = pneg %p472
      %p479 = scmp.eq.s32.totalorder %s33, 1
      %p480 = por %p478, %p479
      %p481 = scmp.ne.s32.totalorder %s473, %s476
      %p482 = scmp.eq.s32.totalorder %s33, 0
      %p483 = por %p481, %p482
      %p484 = scmp.ne.s32.totalorder %s473, %s476
      %p485 = scmp.eq.s32.totalorder %s38, 1
      %p486 = por %p484, %p485
      %p487 = scmp.ne.s32.totalorder %s476, %s477
      %p488 = scmp.eq.s32.totalorder %s38, 0
      %p489 = por %p487, %p488
      %p490 = scmp.ne.s32.totalorder %s476, %s477
      %p491 = scmp.eq.s32.totalorder %s39, 1
      %p492 = por %p490, %p491
      %p494 = scmp.ne.s32.totalorder %s477, %s493
      %p495 = scmp.eq.s32.totalorder %s39, 0
      %p496 = por %p494, %p495
      %p497 = scmp.le.s32.totalorder 1, %s33
      %p498 = scmp.lt.s32.totalorder %s33, 3
      %p499 = pnand %p497, %p498
      %p500 = pneg %p499
      // Predicated region
      $region9: #{tpu_custom_call.1} parent=5 // pred_check
        _
      $region10: #{tpu_custom_call.1} parent=5 // pred_check_branch
        %502 = sbr.rel (%p499) target = $region12
      $region11: #{tpu_custom_call.1} parent=5 // pred_region
        %s503 = ssub.s32 %s33, 1
        // Predicated region
        $region13: #{tpu_custom_call.1} parent=11 // pred_check
          %p504 = pneg %p146
        $region14: #{tpu_custom_call.1} parent=11 // pred_check_branch
          %506 = sbr.rel (%p504) target = $region16
        $region15: #{tpu_custom_call.1} parent=11 // pred_region
          _
        $region16: #{tpu_custom_call.1} parent=11 // pred_fallthru
          _
        // Predicated region
        $region17: #{tpu_custom_call.1} parent=11 // pred_check
          %p507 = pneg %p167
        $region18: #{tpu_custom_call.1} parent=11 // pred_check_branch
          %509 = sbr.rel (%p507) target = $region20
        $region19: #{tpu_custom_call.1} parent=11 // pred_region
          _
        $region20: #{tpu_custom_call.1} parent=11 // pred_fallthru
          _
        // Predicated region
        $region21: #{tpu_custom_call.1} parent=11 // pred_check
          %p510 = pneg %p188
        $region22: #{tpu_custom_call.1} parent=11 // pred_check_branch
          %512 = sbr.rel (%p510) target = $region24
        $region23: #{tpu_custom_call.1} parent=11 // pred_region
          %514 = vsyncadd [#allocation7], 0
          %s515 = sshll.u32 %s5, 4
          %s516 = int_to_ptr.hbm [resolvable:$true] %s515
          %s517 = sshll.u32 [#allocation6], 4
          %s518 = int_to_ptr.vmem [resolvable:$true] %s517
          %523 = dma.hbm_to_vmem [thread:$0]  %s516, 256, %s518, [#allocation7], 64, 64, 4
        $region24: #{tpu_custom_call.1} parent=11 // pred_fallthru
          _
        // Predicated region
        $region25: #{tpu_custom_call.1} parent=11 // pred_check
          %p524 = pneg %p209
        $region26: #{tpu_custom_call.1} parent=11 // pred_check_branch
          %526 = sbr.rel (%p524) target = $region28
        $region27: #{tpu_custom_call.1} parent=11 // pred_region
          _
        $region28: #{tpu_custom_call.1} parent=11 // pred_fallthru
          _
        // Predicated region
        $region29: #{tpu_custom_call.1} parent=11 // pred_check
          %p527 = pneg %p230
        $region30: #{tpu_custom_call.1} parent=11 // pred_check_branch
          %529 = sbr.rel (%p527) target = $region32
        $region31: #{tpu_custom_call.1} parent=11 // pred_region
          %531 = vsyncadd [#allocation7], 0
          %s532 = sshll.u32 %s7, 4
          %s533 = int_to_ptr.hbm [resolvable:$true] %s532
          %s534 = sshll.u32 [#allocation8], 4
          %s535 = int_to_ptr.vmem [resolvable:$true] %s534
          %540 = dma.hbm_to_vmem [thread:$0]  %s533, 256, %s535, [#allocation7], 64, 64, 4
        $region32: #{tpu_custom_call.1} parent=11 // pred_fallthru
          _
        // Predicated region
        $region33: #{tpu_custom_call.1} parent=11 // pred_check
          %p541 = pneg %p251
        $region34: #{tpu_custom_call.1} parent=11 // pred_check_branch
          %543 = sbr.rel (%p541) target = $region36
        $region35: #{tpu_custom_call.1} parent=11 // pred_region
          _
        $region36: #{tpu_custom_call.1} parent=11 // pred_fallthru
          _
        // Predicated region
        $region37: #{tpu_custom_call.1} parent=11 // pred_check
          %p544 = pneg %p272
        $region38: #{tpu_custom_call.1} parent=11 // pred_check_branch
          %546 = sbr.rel (%p544) target = $region40
        $region39: #{tpu_custom_call.1} parent=11 // pred_region
          %548 = vsyncadd [#allocation10], 0
          %s549 = sshll.u32 %s9, 4
          %s550 = int_to_ptr.hbm [resolvable:$true] %s549
          %s551 = sshll.u32 [#allocation9], 4
          %s552 = int_to_ptr.vmem [resolvable:$true] %s551
          %557 = dma.hbm_to_vmem [thread:$0]  %s550, 256, %s552, [#allocation10], 64, 64, 4
        $region40: #{tpu_custom_call.1} parent=11 // pred_fallthru
          _
        // Predicated region
        $region41: #{tpu_custom_call.1} parent=11 // pred_check
          %p558 = pneg %p293
        $region42: #{tpu_custom_call.1} parent=11 // pred_check_branch
          %560 = sbr.rel (%p558) target = $region44
        $region43: #{tpu_custom_call.1} parent=11 // pred_region
          _
        $region44: #{tpu_custom_call.1} parent=11 // pred_fallthru
          _
        // Predicated region
        $region45: #{tpu_custom_call.1} parent=11 // pred_check
          %p561 = pneg %p314
        $region46: #{tpu_custom_call.1} parent=11 // pred_check_branch
          %563 = sbr.rel (%p561) target = $region48
        $region47: #{tpu_custom_call.1} parent=11 // pred_region
          _
        $region48: #{tpu_custom_call.1} parent=11 // pred_fallthru
          _
        // Predicated region
        $region49: #{tpu_custom_call.1} parent=11 // pred_check
          %p564 = pneg %p335
        $region50: #{tpu_custom_call.1} parent=11 // pred_check_branch
          %566 = sbr.rel (%p564) target = $region52
        $region51: #{tpu_custom_call.1} parent=11 // pred_region
          _
        $region52: #{tpu_custom_call.1} parent=11 // pred_fallthru
          _
        // Predicated region
        $region53: #{tpu_custom_call.1} parent=11 // pred_check
          %p567 = pneg %p356
        $region54: #{tpu_custom_call.1} parent=11 // pred_check_branch
          %569 = sbr.rel (%p567) target = $region56
        $region55: #{tpu_custom_call.1} parent=11 // pred_region
          %571 = vsyncadd [#allocation10], 0
          %s572 = sshll.u32 %s13, 4
          %s573 = int_to_ptr.hbm [resolvable:$true] %s572
          %s574 = sshll.u32 [#allocation11], 4
          %s575 = int_to_ptr.vmem [resolvable:$true] %s574
          %580 = dma.hbm_to_vmem [thread:$0]  %s573, 256, %s575, [#allocation10], 64, 64, 4
        $region56: #{tpu_custom_call.1} parent=11 // pred_fallthru
          _
        // Predicated region
        $region57: #{tpu_custom_call.1} parent=11 // pred_check
          %p581 = pneg %p377
        $region58: #{tpu_custom_call.1} parent=11 // pred_check_branch
          %583 = sbr.rel (%p581) target = $region60
        $region59: #{tpu_custom_call.1} parent=11 // pred_region
          _
        $region60: #{tpu_custom_call.1} parent=11 // pred_fallthru
          _
        // Predicated region
        $region61: #{tpu_custom_call.1} parent=11 // pred_check
          %p584 = pneg %p398
        $region62: #{tpu_custom_call.1} parent=11 // pred_check_branch
          %586 = sbr.rel (%p584) target = $region64
        $region63: #{tpu_custom_call.1} parent=11 // pred_region
          _
        $region64: #{tpu_custom_call.1} parent=11 // pred_fallthru
          _
        // Predicated region
        $region65: #{tpu_custom_call.1} parent=11 // pred_check
          %p587 = pneg %p419
        $region66: #{tpu_custom_call.1} parent=11 // pred_check_branch
          %589 = sbr.rel (%p587) target = $region68
        $region67: #{tpu_custom_call.1} parent=11 // pred_region
          _
        $region68: #{tpu_custom_call.1} parent=11 // pred_fallthru
          _
        // Predicated region
        $region69: #{tpu_custom_call.1} parent=11 // pred_check
          %p590 = pneg %p440
        $region70: #{tpu_custom_call.1} parent=11 // pred_check_branch
          %592 = sbr.rel (%p590) target = $region72
        $region71: #{tpu_custom_call.1} parent=11 // pred_region
          _
        $region72: #{tpu_custom_call.1} parent=11 // pred_fallthru
          _
        // Predicated region
        $region73: #{tpu_custom_call.1} parent=11 // pred_check
          %p593 = pneg %p461
        $region74: #{tpu_custom_call.1} parent=11 // pred_check_branch
          %595 = sbr.rel (%p593) target = $region76
        $region75: #{tpu_custom_call.1} parent=11 // pred_region
          _
        $region76: #{tpu_custom_call.1} parent=11 // pred_fallthru
          _
      $region12: #{tpu_custom_call.1} parent=5 // pred_fallthru
        _
      %p596 = scmp.lt.s32.totalorder %s33, 2
      // Predicated region
      $region77: #{tpu_custom_call.1} parent=5 // pred_check
        %p597 = pneg %p596
      $region78: #{tpu_custom_call.1} parent=5 // pred_check_branch
        %599 = sbr.rel (%p597) target = $region80
      $region79: #{tpu_custom_call.1} parent=5 // pred_region
        // Predicated region
        $region81: #{tpu_custom_call.1} parent=79 // pred_check
          %p600 = pneg %p67
        $region82: #{tpu_custom_call.1} parent=79 // pred_check_branch
          %602 = sbr.rel (%p600) target = $region84
        $region83: #{tpu_custom_call.1} parent=79 // pred_region
          %p603 = scmp.lt.s32.totalorder %s40, 1
          %s604 = scalar_select %p603, %s40, 1
          %p605 = scmp.lt.s32.totalorder %s41, 0
          %s606 = scalar_select %p605, %s41, 0
          %s607 = sadd.s32 %s606, %s604
          %s608 = smul.addr %s607, 8
          %s609 = scalar_lea.vmem %s0, %s608
        $region84: #{tpu_custom_call.1} parent=79 // pred_fallthru
          _
        // Predicated region
        $region85: #{tpu_custom_call.1} parent=79 // pred_check
          %p610 = pneg %p93
        $region86: #{tpu_custom_call.1} parent=79 // pred_check_branch
          %612 = sbr.rel (%p610) target = $region88
        $region87: #{tpu_custom_call.1} parent=79 // pred_region
          %p613 = scmp.lt.s32.totalorder %s40, 1
          %s614 = scalar_select %p613, %s40, 1
          %s615 = smul.addr %s614, 8
          %s616 = scalar_lea.vmem %s1, %s615
        $region88: #{tpu_custom_call.1} parent=79 // pred_fallthru
          _
        // Predicated region
        $region89: #{tpu_custom_call.1} parent=79 // pred_check
          %p617 = pneg %p119
        $region90: #{tpu_custom_call.1} parent=79 // pred_check_branch
          %619 = sbr.rel (%p617) target = $region92
        $region91: #{tpu_custom_call.1} parent=79 // pred_region
          %s620 = sand.u32 %s109, 1
          %s621 = scalar_lea.sflag [#allocation4], %s620
          %s622 = sand.u32 %s109, 1
          %s623 = scalar_lea.vmem [#allocation3], %s622
          %625 = vsyncadd %s621, 0
          %s626 = scalar_lea.hbm %s2, %s40
          %s628 = sshll.u32 %s626, 4
          %s629 = int_to_ptr.hbm [resolvable:$true] %s628
          %s630 = sshll.u32 %s623, 4
          %s631 = int_to_ptr.vmem [resolvable:$true] %s630
          %633 = dma.hbm_to_vmem [thread:$0]  %s629, 16, %s631, %s621
        $region92: #{tpu_custom_call.1} parent=79 // pred_fallthru
          _
      $region80: #{tpu_custom_call.1} parent=5 // pred_fallthru
        _
      %p634 = scmp.le.s32.totalorder 1, %s33
      %p635 = scmp.lt.s32.totalorder %s33, 3
      %p636 = pnand %p634, %p635
      %p637 = pneg %p636
      // Predicated region
      $region93: #{tpu_custom_call.1} parent=5 // pred_check
        _
      $region94: #{tpu_custom_call.1} parent=5 // pred_check_branch
        %639 = sbr.rel (%p636) target = $region96
      $region95: #{tpu_custom_call.1} parent=5 // pred_region
        %s640 = ssub.s32 %s33, 1
        %s641 = sand.u32 %s112, 1
        %s642 = scalar_lea.sflag [#allocation4], %s641
        %s643 = sand.u32 %s112, 1
        %s644 = scalar_lea.vmem [#allocation3], %s643
        // Predicated region
        $region97: #{tpu_custom_call.1} parent=95 // pred_check
          %p645 = pneg %p125
        $region98: #{tpu_custom_call.1} parent=95 // pred_check_branch
          %647 = sbr.rel (%p645) target = $region100
        $region99: #{tpu_custom_call.1} parent=95 // pred_region
          %649 = dma.done %s642, 16
        $region100: #{tpu_custom_call.1} parent=95 // pred_fallthru
          _
        // Predicated region
        $region101: #{tpu_custom_call.1} parent=95 // pred_check
          %p650 = pneg %p188
        $region102: #{tpu_custom_call.1} parent=95 // pred_check_branch
          %652 = sbr.rel (%p650) target = $region104
        $region103: #{tpu_custom_call.1} parent=95 // pred_region
          %654 = dma.done [#allocation7], 256
        $region104: #{tpu_custom_call.1} parent=95 // pred_fallthru
          _
        // Predicated region
        $region105: #{tpu_custom_call.1} parent=95 // pred_check
          %p655 = pneg %p230
        $region106: #{tpu_custom_call.1} parent=95 // pred_check_branch
          %657 = sbr.rel (%p655) target = $region108
        $region107: #{tpu_custom_call.1} parent=95 // pred_region
          %659 = dma.done [#allocation7], 256
        $region108: #{tpu_custom_call.1} parent=95 // pred_fallthru
          _
        // Predicated region
        $region109: #{tpu_custom_call.1} parent=95 // pred_check
          %p660 = pneg %p272
        $region110: #{tpu_custom_call.1} parent=95 // pred_check_branch
          %662 = sbr.rel (%p660) target = $region112
        $region111: #{tpu_custom_call.1} parent=95 // pred_region
          %664 = dma.done [#allocation10], 256
        $region112: #{tpu_custom_call.1} parent=95 // pred_fallthru
          _
        // Predicated region
        $region113: #{tpu_custom_call.1} parent=95 // pred_check
          %p665 = pneg %p356
        $region114: #{tpu_custom_call.1} parent=95 // pred_check_branch
          %667 = sbr.rel (%p665) target = $region116
        $region115: #{tpu_custom_call.1} parent=95 // pred_region
          %669 = dma.done [#allocation10], 256
        $region116: #{tpu_custom_call.1} parent=95 // pred_fallthru
          _
        %p670 = scmp.lt.s32.totalorder %s42, 1
        %s671 = scalar_select %p670, %s42, 1
        %p672 = scmp.lt.s32.totalorder %s43, 0
        %s673 = scalar_select %p672, %s43, 0
        %s674 = sadd.s32 %s673, %s671
        %s675 = smul.addr %s674, 8
        %s676 = scalar_lea.vmem %s0, %s675
        %p677 = pneg %p73
        %p678 = pneg %p70
        %p679 = scmp.lt.s32.totalorder %s42, 1
        %s680 = scalar_select %p679, %s42, 1
        %s681 = smul.addr %s680, 8
        %s682 = scalar_lea.vmem %s1, %s681
        %p683 = pneg %p99
        %p684 = pneg %p96
        %s685 = sand.u32 %s112, 1
        %s686 = scalar_lea.sflag [#allocation4], %s685
        %s687 = sand.u32 %s112, 1
        %s688 = scalar_lea.vmem [#allocation3], %s687
        %p689 = pneg %p125
        %p690 = pneg %p122
        %p691 = pneg %p146
        %p692 = pneg %p143
        %p693 = pneg %p167
        %p694 = pneg %p164
        %p695 = pneg %p188
        %p696 = pneg %p185
        %p697 = pneg %p209
        %p698 = pneg %p206
        %p699 = pneg %p230
        %p700 = pneg %p227
        %p701 = pneg %p251
        %p702 = pneg %p248
        %p703 = pneg %p272
        %p704 = pneg %p269
        %p705 = pneg %p293
        %p706 = pneg %p290
        %p707 = pneg %p314
        %p708 = pneg %p311
        %p709 = pneg %p335
        %p710 = pneg %p332
        %p711 = pneg %p356
        %p712 = pneg %p353
        %p713 = pneg %p377
        %p714 = pneg %p374
        %p715 = pneg %p398
        %p716 = pneg %p395
        %p717 = pneg %p419
        %p718 = pneg %p416
        %p719 = pneg %p440
        %p720 = pneg %p437
        %p721 = pneg %p461
        %p722 = pneg %p458
        %p723 = pneg %p489
        %p724 = pneg %p486
        %s725 = sand.u32 %s476, 1
        %s726 = scalar_lea.sflag [#allocation5], %s725
        %s727 = sand.u32 %s476, 1
        %s728 = smul.addr %s727, 8
        %s729 = scalar_lea.vmem [#allocation12], %s728
        %p730 = scmp.lt.s32.totalorder %s42, 1
        %s731 = scalar_select %p730, %s42, 1
        %p732 = scmp.lt.s32.totalorder %s43, 0
        %s733 = scalar_select %p732, %s43, 0
        %s734 = sadd.s32 %s733, %s731
        %s735 = smul.addr %s734, 8
        %s736 = scalar_lea.vmem %s0, %s735
        %p737 = scmp.lt.s32.totalorder %s42, 1
        %s738 = scalar_select %p737, %s42, 1
        %s739 = smul.addr %s738, 8
        %s740 = scalar_lea.vmem %s1, %s739
        %v742 = vld [vmem:[%s736] sm:$0xff]
        %v743 = vld [vmem:[%s740] sm:$0xff]
        %v744 = vld [vmem:[%s644] sm:$0x1]
        %v745 = vld [vmem:[%s15] sm:$0x1]
        %v746 = vld [vmem:[%s16] sm:$0x1]
        %v747 = vld [vmem:[%s17] sm:$0x1]
        %v748 = vld [vmem:[%s18] sm:$0x1]
        %v749 = vpack.c.bf16 %v742, %v742
        %v750 = vpack.c.bf16 %v743, %v743
        %v751 = vld [vmem:[%s3] sm:$0xf]
        %v752 = vld [vmem:[%s3 + $0x4] sm:$0xf]
        %v753 = vld [vmem:[%s3 + $0x8] sm:$0xf]
        %v754 = vld [vmem:[%s3 + $0xc] sm:$0xf]
        %v755 = vld [vmem:[%s4] sm:$0x1]
        %v757 = vperm.slane %v755, 0
        %v763 = vunpack.c.l.b16 %v751
        %v764 = vunpack.c.l.b16 %v752
        %v765 = vunpack.c.l.b16 %v753
        %v766 = vunpack.c.l.b16 %v754
        %v767 = vpack.c.b16 %v764, %v763
        %v768 = vpack.c.b16 %v766, %v765
        %vm769 = vcmask 261120
        %v771 = vsel %vm769, %v749, 0
        %v774 = vsel %vm769, %v767, 0
        %v777 = vsel %vm769, %v768, 0
        %779 = vmatpush.bf16.xpose.msra.mxu0 0
        %780 = vmatpush.bf16.xpose.msra.mxu0 0
        %781 = vmatpush.bf16.xpose.msra.mxu0 0
        %782 = vmatpush.bf16.xpose.msra.mxu0 0
        %783 = vmatpush.bf16.xpose.msra.mxu0 0
        %784 = vmatpush.bf16.xpose.msra.mxu0 0
        %785 = vmatpush.bf16.xpose.msra.mxu0 %v777
        %786 = vmatpush.bf16.xpose.msra.mxu0 %v774
        %787 = vmatmul.bf16.gmra.mxu0 %v771
        %v788 = vpop.f32.mrf.mxu0
        %v789 = vadd.f32 %v757, %v788
        %v790 = vpop.f32.mrf.mxu0
        %791 = vdwg.mxu0
        %v792 = vld [vmem:[#allocation6] sm:$0xf]
        %v793 = vld [vmem:[#allocation6 + $0x4] sm:$0xf]
        %v794 = vld [vmem:[#allocation6 + $0x8] sm:$0xf]
        %v795 = vld [vmem:[#allocation6 + $0xc] sm:$0xf]
        %v796 = vld [vmem:[%s6] sm:$0x1]
        %v798 = vperm.slane %v796, 0
        %v804 = vunpack.c.l.b16 %v792
        %v805 = vunpack.c.l.b16 %v793
        %v806 = vunpack.c.l.b16 %v794
        %v807 = vunpack.c.l.b16 %v795
        %v808 = vpack.c.b16 %v805, %v804
        %v809 = vpack.c.b16 %v807, %v806
        %v811 = vsel %vm769, %v750, 0
        %v814 = vsel %vm769, %v808, 0
        %v817 = vsel %vm769, %v809, 0
        %819 = vmatpush.bf16.xpose.msra.mxu0 0
        %820 = vmatpush.bf16.xpose.msra.mxu0 0
        %821 = vmatpush.bf16.xpose.msra.mxu0 0
        %822 = vmatpush.bf16.xpose.msra.mxu0 0
        %823 = vmatpush.bf16.xpose.msra.mxu0 0
        %824 = vmatpush.bf16.xpose.msra.mxu0 0
        %825 = vmatpush.bf16.xpose.msra.mxu0 %v817
        %826 = vmatpush.bf16.xpose.msra.mxu0 %v814
        %827 = vmatmul.bf16.gmra.mxu0 %v811
        %v828 = vpop.f32.mrf.mxu0
        %v829 = vadd.f32 %v798, %v828
        %v830 = vpop.f32.mrf.mxu0
        %831 = vdwg.mxu0
        %v832 = vld [vmem:[#allocation8] sm:$0xf]
        %v833 = vld [vmem:[#allocation8 + $0x4] sm:$0xf]
        %v834 = vld [vmem:[#allocation8 + $0x8] sm:$0xf]
        %v835 = vld [vmem:[#allocation8 + $0xc] sm:$0xf]
        %v836 = vld [vmem:[%s8] sm:$0x1]
        %v838 = vperm.slane %v836, 0
        %v844 = vunpack.c.l.b16 %v832
        %v845 = vunpack.c.l.b16 %v833
        %v846 = vunpack.c.l.b16 %v834
        %v847 = vunpack.c.l.b16 %v835
        %v848 = vpack.c.b16 %v845, %v844
        %v849 = vpack.c.b16 %v847, %v846
        %v851 = vsel %vm769, %v848, 0
        %v854 = vsel %vm769, %v849, 0
        %856 = vmatpush.bf16.xpose.msra.mxu0 0
        %857 = vmatpush.bf16.xpose.msra.mxu0 0
        %858 = vmatpush.bf16.xpose.msra.mxu0 0
        %859 = vmatpush.bf16.xpose.msra.mxu0 0
        %860 = vmatpush.bf16.xpose.msra.mxu0 0
        %861 = vmatpush.bf16.xpose.msra.mxu0 0
        %862 = vmatpush.bf16.xpose.msra.mxu0 %v854
        %863 = vmatpush.bf16.xpose.msra.mxu0 %v851
        %864 = vmatmul.bf16.gmra.mxu0 %v811
        %v865 = vpop.f32.mrf.mxu0
        %v866 = vadd.f32 %v838, %v865
        %v867 = vpop.f32.mrf.mxu0
        %868 = vdwg.mxu0
        %v869 = vmul.f32 %v789, 0.25
        %v870 = vpack.c.bf16 %v869, %v869
        %v871 = vpack.c.bf16 %v829, %v829
        %v872 = vpack.c.bf16 %v866, %v866
        %v874 = vperm.slane %v744, 0
        %vm876 = vcmask 130048
        %v878 = vsel %vm876, %v870, 0
        %v881 = vsel %vm876, %v871, 0
        %883 = vmatpush.bf16.xpose.msra.mxu0 0
        %884 = vmatpush.bf16.xpose.msra.mxu0 0
        %885 = vmatpush.bf16.xpose.msra.mxu0 0
        %886 = vmatpush.bf16.xpose.msra.mxu0 0
        %887 = vmatpush.bf16.xpose.msra.mxu0 0
        %888 = vmatpush.bf16.xpose.msra.mxu0 0
        %889 = vmatpush.bf16.xpose.msra.mxu0 0
        %890 = vmatpush.bf16.xpose.msra.mxu0 %v881
        %891 = vmatmul.bf16.gmra.mxu0 %v878
        %v892 = vpop.f32.mrf.mxu0
        %v893 = vadd.f32 %v874, %v892
        %v894 = vpop.f32.mrf.mxu0
        %895 = vdwg.mxu0
        %vm896 = vcmask 64512
        %v897 = vsel %vm896, %v893, -inf
        %898 = vmax.xlane.f32.xlu0 %v897
        %v899 = vpop.xlane.xlu0 %898
        %v900 = vsub.f32 %v893, %v899
        %v901 = vmul.f32 %v900, 1.442695
        %v902 = vpow.pop %v901
        %v903 = vsel %vm896, %v902, 0.0
        %904 = vadd.xlane.f32.xlu0 %v903
        %v905 = vpop.xlane.xlu0 %904
        %v906 = vrcp.pop %v905
        %v907 = vmul.f32 %v905, %v906
        %v908 = vsub.f32 1.0, %v907
        %v909 = vmul.f32 %v906, %v908
        %v910 = vadd.f32 %v906, %v909
        %vm911 = vweird.f32 %v905
        %vm912 = vweird.f32 %v906
        %vm913 = vmor %vm911, %vm912
        %v914 = vsel %vm913, %v906, %v910
        %v915 = vand.u32 2147483647, %v905
        %vm916 = vcmp.eq.f32.partialorder %v915, 8.507059e+37
        %v917 = vand.u32 %v905, 2147483648
        %v918 = vor.u32 1.1754944e-38, %v917
        %v919 = vsel %vm916, %v918, %v914
        %v920 = vmul.f32 %v902, %v919
        %v921 = vpack.c.bf16 %v920, %v920
        %v923 = vsel %vm896, %v921, 0
        %vm925 = vcmask 1043456
        %v927 = vsel %vm925, %v872, 0
        %929 = vmatpush.bf16.msra.mxu0 0
        %930 = vmatpush.bf16.msra.mxu0 0
        %931 = vmatpush.bf16.msra.mxu0 0
        %932 = vmatpush.bf16.msra.mxu0 0
        %933 = vmatpush.bf16.msra.mxu0 0
        %934 = vmatpush.bf16.msra.mxu0 0
        %935 = vmatpush.bf16.msra.mxu0 0
        %936 = vmatpush.bf16.msra.mxu0 %v927
        %937 = vmatmul.bf16.gmra.mxu0 %v923
        %v938 = vpop.f32.mrf.mxu0
        %v939 = vadd.f32 0.0, %v938
        %v940 = vpop.f32.mrf.mxu0
        %941 = vdwg.mxu0
        %942 = vst.msk [vmem:[#allocation2] sm:$0xff] %vm876, %v939
        %v944 = vunpack.c.l.b16 %v870
        %v945 = vpack.c.b16 %v944, %v944
        %946 = vrot.lane.b32.xlu0 %v945, 112
        %v947 = vpop.permute.xlu0 %946
        %v949 = vunpack.c.l.b16 %v871
        %v950 = vpack.c.b16 %v949, %v949
        %951 = vrot.lane.b32.xlu0 %v950, 112
        %v952 = vpop.permute.xlu0 %951
        %v954 = vsel %vm876, %v947, 0
        %v957 = vsel %vm876, %v952, 0
        %959 = vmatpush.bf16.xpose.msra.mxu0 0
        %960 = vmatpush.bf16.xpose.msra.mxu0 0
        %961 = vmatpush.bf16.xpose.msra.mxu0 0
        %962 = vmatpush.bf16.xpose.msra.mxu0 0
        %963 = vmatpush.bf16.xpose.msra.mxu0 0
        %964 = vmatpush.bf16.xpose.msra.mxu0 0
        %965 = vmatpush.bf16.xpose.msra.mxu0 0
        %966 = vmatpush.bf16.xpose.msra.mxu0 %v957
        %967 = vmatmul.bf16.gmra.mxu0 %v954
        %v968 = vpop.f32.mrf.mxu0
        %v969 = vadd.f32 %v874, %v968
        %v970 = vpop.f32.mrf.mxu0
        %971 = vdwg.mxu0
        %v972 = vsel %vm896, %v969, -inf
        %973 = vmax.xlane.f32.xlu0 %v972
        %v974 = vpop.xlane.xlu0 %973
        %v975 = vsub.f32 %v969, %v974
        %v976 = vmul.f32 %v975, 1.442695
        %v977 = vpow.pop %v976
        %v978 = vsel %vm896, %v977, 0.0
        %979 = vadd.xlane.f32.xlu0 %v978
        %v980 = vpop.xlane.xlu0 %979
        %v981 = vrcp.pop %v980
        %v982 = vmul.f32 %v980, %v981
        %v983 = vsub.f32 1.0, %v982
        %v984 = vmul.f32 %v981, %v983
        %v985 = vadd.f32 %v981, %v984
        %vm986 = vweird.f32 %v980
        %vm987 = vweird.f32 %v981
        %vm988 = vmor %vm986, %vm987
        %v989 = vsel %vm988, %v981, %v985
        %v990 = vand.u32 2147483647, %v980
        %vm991 = vcmp.eq.f32.partialorder %v990, 8.507059e+37
        %v992 = vand.u32 %v980, 2147483648
        %v993 = vor.u32 1.1754944e-38, %v992
        %v994 = vsel %vm991, %v993, %v989
        %v995 = vmul.f32 %v977, %v994
        %v996 = vpack.c.bf16 %v995, %v995
        %v998 = vunpack.c.l.b16 %v872
        %v999 = vpack.c.b16 %v998, %v998
        %1000 = vrot.lane.b32.xlu0 %v999, 112
        %v1001 = vpop.permute.xlu0 %1000
        %v1003 = vsel %vm896, %v996, 0
        %v1006 = vsel %vm925, %v1001, 0
        %1008 = vmatpush.bf16.msra.mxu0 0
        %1009 = vmatpush.bf16.msra.mxu0 0
        %1010 = vmatpush.bf16.msra.mxu0 0
        %1011 = vmatpush.bf16.msra.mxu0 0
        %1012 = vmatpush.bf16.msra.mxu0 0
        %1013 = vmatpush.bf16.msra.mxu0 0
        %1014 = vmatpush.bf16.msra.mxu0 0
        %1015 = vmatpush.bf16.msra.mxu0 %v1006
        %1016 = vmatmul.bf16.gmra.mxu0 %v1003
        %v1017 = vpop.f32.mrf.mxu0
        %v1018 = vadd.f32 0.0, %v1017
        %v1019 = vpop.f32.mrf.mxu0
        %1020 = vdwg.mxu0
        %1022 = vrot.lane.b32.xlu0 %v1018, 16
        %v1023 = vpop.permute.xlu0 %1022
        %vm1025 = vcmask 261248
        %1026 = vst.msk [vmem:[#allocation2] sm:$0xff] %vm1025, %v1023
        %v1027 = vld [vmem:[#allocation2] sm:$0xff]
        %v1028 = vpack.c.bf16 %v1027, %v1027
        %v1029 = vld [vmem:[#allocation9] sm:$0xf]
        %v1030 = vld [vmem:[#allocation9 + $0x4] sm:$0xf]
        %v1031 = vld [vmem:[#allocation9 + $0x8] sm:$0xf]
        %v1032 = vld [vmem:[#allocation9 + $0xc] sm:$0xf]
        %v1033 = vld [vmem:[%s10] sm:$0x1]
        %v1035 = vperm.slane %v1033, 0
        %v1041 = vunpack.c.l.b16 %v1029
        %v1042 = vunpack.c.l.b16 %v1030
        %v1043 = vunpack.c.l.b16 %v1031
        %v1044 = vunpack.c.l.b16 %v1032
        %v1045 = vpack.c.b16 %v1042, %v1041
        %v1046 = vpack.c.b16 %v1044, %v1043
        %v1048 = vsel %vm769, %v1028, 0
        %v1051 = vsel %vm769, %v1045, 0
        %v1054 = vsel %vm769, %v1046, 0
        %1056 = vmatpush.bf16.xpose.msra.mxu0 0
        %1057 = vmatpush.bf16.xpose.msra.mxu0 0
        %1058 = vmatpush.bf16.xpose.msra.mxu0 0
        %1059 = vmatpush.bf16.xpose.msra.mxu0 0
        %1060 = vmatpush.bf16.xpose.msra.mxu0 0
        %1061 = vmatpush.bf16.xpose.msra.mxu0 0
        %1062 = vmatpush.bf16.xpose.msra.mxu0 %v1054
        %1063 = vmatpush.bf16.xpose.msra.mxu0 %v1051
        %1064 = vmatmul.bf16.gmra.mxu0 %v1048
        %v1065 = vpop.f32.mrf.mxu0
        %v1066 = vadd.f32 %v1035, %v1065
        %v1067 = vpop.f32.mrf.mxu0
        %1068 = vdwg.mxu0
        %v1069 = vadd.f32 %v1066, %v742
        %v1070 = vsel %vm769, %v1069, 0.0
        %1071 = vadd.xlane.f32.xlu0 %v1070
        %v1072 = vpop.xlane.xlu0 %1071
        %v1073 = vrcp.pop 32.0
        %v1074 = vmul.f32 32.0, %v1073
        %v1075 = vsub.f32 1.0, %v1074
        %v1076 = vmul.f32 %v1073, %v1075
        %v1077 = vadd.f32 %v1073, %v1076
        %vm1078 = vweird.f32 %v1073
        %v1079 = vsel %vm1078, %v1073, %v1077
        %v1080 = vmul.f32 %v1072, %v1079
        %v1081 = vsub.f32 %v1069, %v1080
        %v1082 = vmul.f32 %v1081, %v1081
        %v1083 = vsel %vm769, %v1082, 0.0
        %1084 = vadd.xlane.f32.xlu0 %v1083
        %v1085 = vpop.xlane.xlu0 %1084
        %v1086 = vmul.f32 %v1085, %v1079
        %v1087 = vadd.f32 %v1086, 1e-12
        %v1088 = vrsqrt.pop %v1087
        %v1089 = vmul.f32 %v1088, %v1087
        %v1090 = vmul.f32 %v1089, %v1088
        %v1091 = vmul.f32 0.5, %v1090
        %v1092 = vsub.f32 1.5, %v1091
        %v1093 = vmul.f32 %v1088, %v1092
        %vm1094 = vweird.f32 %v1087
        %vm1095 = vweird.f32 %v1088
        %vm1096 = vmor %vm1094, %vm1095
        %v1097 = vsel %vm1096, %v1088, %v1093
        %v1098 = vmul.f32 %v1081, %v1097
        %v1100 = vperm.slane %v745, 0
        %v1102 = vmul.f32 %v1098, %v1100
        %v1104 = vperm.slane %v746, 0
        %v1106 = vadd.f32 %v1102, %v1104
        %v1107 = vpack.c.bf16 %v1106, %v1106
        %v1108 = vld [vmem:[%s11] sm:$0xf]
        %v1109 = vld [vmem:[%s11 + $0x4] sm:$0xf]
        %v1110 = vld [vmem:[%s11 + $0x8] sm:$0xf]
        %v1111 = vld [vmem:[%s11 + $0xc] sm:$0xf]
        %v1112 = vld [vmem:[%s11 + $0x10] sm:$0xf]
        %v1113 = vld [vmem:[%s11 + $0x14] sm:$0xf]
        %v1114 = vld [vmem:[%s11 + $0x18] sm:$0xf]
        %v1115 = vld [vmem:[%s11 + $0x1c] sm:$0xf]
        %v1116 = vld [vmem:[%s12] sm:$0x1]
        %v1118 = vperm.slane %v1116, 0
        %v1128 = vunpack.c.l.b16 %v1108
        %v1129 = vunpack.c.l.b16 %v1109
        %v1130 = vunpack.c.l.b16 %v1110
        %v1131 = vunpack.c.l.b16 %v1111
        %v1132 = vunpack.c.l.b16 %v1112
        %v1133 = vunpack.c.l.b16 %v1113
        %v1134 = vunpack.c.l.b16 %v1114
        %v1135 = vunpack.c.l.b16 %v1115
        %v1136 = vpack.c.b16 %v1129, %v1128
        %v1137 = vpack.c.b16 %v1131, %v1130
        %v1138 = vpack.c.b16 %v1133, %v1132
        %v1139 = vpack.c.b16 %v1135, %v1134
        %v1141 = vsel %vm769, %v1107, 0
        %v1144 = vsel %vm769, %v1136, 0
        %v1147 = vsel %vm769, %v1137, 0
        %v1150 = vsel %vm769, %v1138, 0
        %v1153 = vsel %vm769, %v1139, 0
        %1155 = vmatpush.bf16.xpose.msra.mxu0 0
        %1156 = vmatpush.bf16.xpose.msra.mxu0 0
        %1157 = vmatpush.bf16.xpose.msra.mxu0 0
        %1158 = vmatpush.bf16.xpose.msra.mxu0 0
        %1159 = vmatpush.bf16.xpose.msra.mxu0 %v1153
        %1160 = vmatpush.bf16.xpose.msra.mxu0 %v1150
        %1161 = vmatpush.bf16.xpose.msra.mxu0 %v1147
        %1162 = vmatpush.bf16.xpose.msra.mxu0 %v1144
        %1163 = vmatmul.bf16.gmra.mxu0 %v1141
        %v1164 = vpop.f32.mrf.mxu0
        %v1165 = vadd.f32 %v1118, %v1164
        %v1166 = vpop.f32.mrf.mxu0
        %1167 = vdwg.mxu0
        %v1168 = vmul.f32 %v1165, 0.5
        %v1169 = vmul.f32 %v1165, 0.044715
        %v1170 = vmul.f32 %v1169, %v1165
        %v1171 = vmul.f32 %v1170, %v1165
        %v1172 = vadd.f32 %v1165, %v1171
        %v1173 = vmul.f32 %v1172, 0.7978846
        %v1174 = vtanh.pop %v1173
        %v1175 = vadd.f32 %v1174, 1.0
        %v1176 = vmul.f32 %v1168, %v1175
        %v1177 = vpack.c.bf16 %v1176, %v1176
        %v1178 = vld [vmem:[#allocation11] sm:$0xf]
        %v1179 = vld [vmem:[#allocation11 + $0x4] sm:$0xf]
        %v1180 = vld [vmem:[#allocation11 + $0x8] sm:$0xf]
        %v1181 = vld [vmem:[#allocation11 + $0xc] sm:$0xf]
        %v1182 = vld [vmem:[%s14] sm:$0x1]
        %v1184 = vperm.slane %v1182, 0
        %v1190 = vunpack.c.l.b16 %v1178
        %v1191 = vunpack.c.l.b16 %v1179
        %v1192 = vunpack.c.l.b16 %v1180
        %v1193 = vunpack.c.l.b16 %v1181
        %v1194 = vpack.c.b16 %v1191, %v1190
        %v1195 = vpack.c.b16 %v1193, %v1192
        %vm1196 = vcmask 523264
        %v1198 = vsel %vm1196, %v1177, 0
        %v1201 = vsel %vm1196, %v1194, 0
        %v1204 = vsel %vm1196, %v1195, 0
        %1206 = vmatpush.bf16.xpose.msra.mxu0 0
        %1207 = vmatpush.bf16.xpose.msra.mxu0 0
        %1208 = vmatpush.bf16.xpose.msra.mxu0 0
        %1209 = vmatpush.bf16.xpose.msra.mxu0 0
        %1210 = vmatpush.bf16.xpose.msra.mxu0 0
        %1211 = vmatpush.bf16.xpose.msra.mxu0 0
        %1212 = vmatpush.bf16.xpose.msra.mxu0 %v1204
        %1213 = vmatpush.bf16.xpose.msra.mxu0 %v1201
        %1214 = vmatmul.bf16.gmra.mxu0 %v1198
        %v1215 = vpop.f32.mrf.mxu0
        %v1216 = vadd.f32 %v1184, %v1215
        %v1217 = vpop.f32.mrf.mxu0
        %1218 = vdwg.mxu0
        %v1219 = vadd.f32 %v1216, %v1106
        %v1220 = vsel %vm769, %v1219, 0.0
        %1221 = vadd.xlane.f32.xlu0 %v1220
        %v1222 = vpop.xlane.xlu0 %1221
        %v1223 = vmul.f32 %v1222, %v1079
        %v1224 = vsub.f32 %v1219, %v1223
        %v1225 = vmul.f32 %v1224, %v1224
        %v1226 = vsel %vm769, %v1225, 0.0
        %1227 = vadd.xlane.f32.xlu0 %v1226
        %v1228 = vpop.xlane.xlu0 %1227
        %v1229 = vmul.f32 %v1228, %v1079
        %v1230 = vadd.f32 %v1229, 1e-12
        %v1231 = vrsqrt.pop %v1230
        %v1232 = vmul.f32 %v1231, %v1230
        %v1233 = vmul.f32 %v1232, %v1231
        %v1234 = vmul.f32 0.5, %v1233
        %v1235 = vsub.f32 1.5, %v1234
        %v1236 = vmul.f32 %v1231, %v1235
        %vm1237 = vweird.f32 %v1230
        %vm1238 = vweird.f32 %v1231
        %vm1239 = vmor %vm1237, %vm1238
        %v1240 = vsel %vm1239, %v1231, %v1236
        %v1241 = vmul.f32 %v1224, %v1240
        %v1243 = vperm.slane %v747, 0
        %v1245 = vmul.f32 %v1241, %v1243
        %v1247 = vperm.slane %v748, 0
        %v1249 = vadd.f32 %v1245, %v1247
        %1250 = vst.msk [vmem:[%s729] sm:$0xff] %vm769, %v1249
        %s1251 = sand.u32 %s476, 1
        %s1252 = scalar_lea.sflag [#allocation5], %s1251
        %s1253 = sand.u32 %s476, 1
        %s1254 = smul.addr %s1253, 8
        %s1255 = scalar_lea.vmem [#allocation12], %s1254
        // Predicated region
        $region117: #{tpu_custom_call.1} parent=95 // pred_check
          %p1256 = pneg %p486
        $region118: #{tpu_custom_call.1} parent=95 // pred_check_branch
          %1258 = sbr.rel (%p1256) target = $region120
        $region119: #{tpu_custom_call.1} parent=95 // pred_region
          %1260 = vsyncadd %s1252, 0
          %s1261 = sadd.s32 %s43, %s42
          %s1262 = smul.addr %s1261, 8
          %s1263 = scalar_lea.hbm %s19, %s1262
          %s1265 = sshll.u32 %s1255, 4
          %s1266 = int_to_ptr.vmem [resolvable:$true] %s1265
          %s1267 = sshll.u32 %s1263, 4
          %s1268 = int_to_ptr.hbm [resolvable:$true] %s1267
          %1270 = dma.vmem_to_hbm [thread:$0]  %s1266, 128, %s1268, %s1252
        $region120: #{tpu_custom_call.1} parent=95 // pred_fallthru
          _
      $region96: #{tpu_custom_call.1} parent=5 // pred_fallthru
        _
      %p1271 = scmp.le.s32.totalorder 2, %s33
      // Predicated region
      $region121: #{tpu_custom_call.1} parent=5 // pred_check
        %p1272 = pneg %p1271
      $region122: #{tpu_custom_call.1} parent=5 // pred_check_branch
        %1274 = sbr.rel (%p1272) target = $region124
      $region123: #{tpu_custom_call.1} parent=5 // pred_region
        %s1275 = ssub.s32 %s33, 2
        // Predicated region
        $region125: #{tpu_custom_call.1} parent=123 // pred_check
          %p1276 = pneg %p492
        $region126: #{tpu_custom_call.1} parent=123 // pred_check_branch
          %1278 = sbr.rel (%p1276) target = $region128
        $region127: #{tpu_custom_call.1} parent=123 // pred_region
          %s1279 = sand.u32 %s477, 1
          %s1280 = scalar_lea.sflag [#allocation5], %s1279
          %s1281 = sand.u32 %s477, 1
          %s1282 = smul.addr %s1281, 8
          %s1283 = scalar_lea.vmem [#allocation12], %s1282
          %1285 = dma.done %s1280, 128
        $region128: #{tpu_custom_call.1} parent=123 // pred_fallthru
          _
      $region124: #{tpu_custom_call.1} parent=5 // pred_fallthru
        _
    $region6: #{tpu_custom_call.1} parent=1 // loop_footer
      %s37 = sadd.s32 1, %s33
    $region7: #{tpu_custom_call.1} parent=1 // loop_footer_branch
      %32 = sbr.rel target = $region3
    $region8: #{tpu_custom_call.1} parent=1 // loop_exit
      _
    %1286 = vsyncpa [#allocation4], 1
    %s1287 = scalar_lea.sflag [#allocation4], 1
    %1288 = vsyncpa %s1287, 1
    %1289 = vsyncpa [#allocation7], 1
    %1290 = vsyncpa [#allocation10], 1
    %1291 = vsyncpa [#allocation5], 1
    %s1292 = scalar_lea.sflag [#allocation5], 1
    %1293 = vsyncpa %s1292, 1

</llo_original>
